<compile_context>
chip_gen: v6e
topology: v6e:2x2x1
jax: 0.10.0
libtpu: 0.0.40
codegen_flags: <defaults>
</compile_context>

<pallas_src>
import jax
import jax.numpy as jnp
from jax.experimental import pallas as pl
from jax.experimental.pallas import tpu as pltpu

NUM_CLASSES = 10
FEAT_DIM = 1000          # backbone (resnet18/vgg16) output dim
HIDDEN = 512
C_PAD = 128              # num_classes -> 128 (lane-dense output tile; sliced after)


def _classifier_kernel(x_ref, w1_ref, b1_ref, w2_ref, b2_ref, w3_ref, b3_ref, o_ref):
    # Fused 3-layer MLP on one batch tile; weights are VMEM-resident across tiles.
    x = x_ref[...].astype(jnp.bfloat16)                                   # f32 DMA, VPU cast
    h1 = jnp.dot(x, w1_ref[...], preferred_element_type=jnp.float32) + b1_ref[...]
    h1 = jnp.maximum(h1, 0.0).astype(jnp.bfloat16)                        # ReLU, bf16 for MXU
    h2 = jnp.dot(h1, w2_ref[...], preferred_element_type=jnp.float32) + b2_ref[...]
    h2 = jnp.maximum(h2, 0.0).astype(jnp.bfloat16)                        # ReLU
    logits = jnp.dot(h2, w3_ref[...], preferred_element_type=jnp.float32) + b3_ref[...]
    o_ref[...] = logits.astype(o_ref.dtype)                               # bf16 writeback


def prepare_params(w1, b1, w2, b2, w3, b3):
    """One-time param prep: bf16 weights, padded lane-dense last layer, [1,N] f32 biases."""
    bf = jnp.bfloat16
    w1_p = w1.astype(bf)                                                   # [1000, 512]
    w2_p = w2.astype(bf)                                                   # [512, 512]
    w3_p = jnp.zeros((HIDDEN, C_PAD), bf).at[:, :NUM_CLASSES].set(w3.astype(bf))
    b1_p = b1.reshape(1, HIDDEN).astype(jnp.float32)
    b2_p = b2.reshape(1, HIDDEN).astype(jnp.float32)
    b3_p = jnp.zeros((1, C_PAD), jnp.float32).at[:, :NUM_CLASSES].set(b3.astype(jnp.float32))
    return w1_p, b1_p, w2_p, b2_p, w3_p, b3_p


def _pick_batch_tile(B):
    """Batch tile: full-array block for tiny batches; big tiles (but >=2 of them,
    for the v7x megacore split) for large batches."""
    if B <= 128:
        return B                       # block == full array dims -> (8,128) rule satisfied
    if B >= 2048:
        tb = 1024
    elif B >= 1024:
        tb = 512
    else:
        tb = 256
    # Guarantee at least 2 grid tiles so dimension_semantics=("parallel",) can
    # shard across both TensorCores on v7x (harmless on 1-TC v5e/v6e).
    while pl.cdiv(B, tb) < 2 and tb > 128:
        tb //= 2
    return tb


@jax.jit
def classifier_forward(feats, w1_p, b1_p, w2_p, b2_p, w3_p, b3_p):
    """feats: [B, 1000] float32 -> logits [B, NUM_CLASSES] float32.

    Params must come from prepare_params() (bf16, pre-padded).
    """
    B, K = feats.shape
    assert K == FEAT_DIM

    tile_b = _pick_batch_tile(B)
    num_tiles = pl.cdiv(B, tile_b)

    flops = 2 * B * (FEAT_DIM * HIDDEN + HIDDEN * HIDDEN + HIDDEN * C_PAD)
    weight_bytes = 2 * (FEAT_DIM * HIDDEN + HIDDEN * HIDDEN + HIDDEN * C_PAD)  # bf16
    bias_bytes = 4 * (HIDDEN + HIDDEN + C_PAD)
    io_bytes = 4 * B * FEAT_DIM + 2 * B * C_PAD                                # f32 in, bf16 out
    cost = pl.CostEstimate(
        flops=flops, transcendentals=0,
        bytes_accessed=weight_bytes + bias_bytes + io_bytes)

    out = pl.pallas_call(
        _classifier_kernel,
        out_shape=jax.ShapeDtypeStruct((B, C_PAD), jnp.bfloat16),
        grid=(num_tiles,),
        in_specs=[
            pl.BlockSpec((tile_b, FEAT_DIM), lambda i: (i, 0)),   # x: walks batch (f32)
            pl.BlockSpec((FEAT_DIM, HIDDEN), lambda i: (0, 0)),   # w1: VMEM-resident
            pl.BlockSpec((1, HIDDEN), lambda i: (0, 0)),          # b1
            pl.BlockSpec((HIDDEN, HIDDEN), lambda i: (0, 0)),     # w2
            pl.BlockSpec((1, HIDDEN), lambda i: (0, 0)),          # b2
            pl.BlockSpec((HIDDEN, C_PAD), lambda i: (0, 0)),      # w3
            pl.BlockSpec((1, C_PAD), lambda i: (0, 0)),           # b3
        ],
        out_specs=pl.BlockSpec((tile_b, C_PAD), lambda i: (i, 0)),
        compiler_params=pltpu.CompilerParams(
            dimension_semantics=("parallel",)),
        cost_estimate=cost,
    )(feats, w1_p, b1_p, w2_p, b2_p, w3_p, b3_p)

    # Tiny slice + cast; real (padded) columns/rows never left the kernel masked stores.
    return out[:, :NUM_CLASSES].astype(jnp.float32)


def init_params(key):
    """Deterministic init matching the nn.Linear shapes (stored as [in, out], f32)."""
    k1, k2, k3, k4, k5, k6 = jax.random.split(key, 6)

    def uniform(k, shape, fan_in):
        bound = 1.0 / jnp.sqrt(jnp.float32(fan_in))
        return jax.random.uniform(k, shape, jnp.float32, -bound, bound)

    w1 = uniform(k1, (FEAT_DIM, HIDDEN), FEAT_DIM)
    b1 = uniform(k2, (HIDDEN,), FEAT_DIM)
    w2 = uniform(k3, (HIDDEN, HIDDEN), HIDDEN)
    b2 = uniform(k4, (HIDDEN,), HIDDEN)
    w3 = uniform(k5, (HIDDEN, NUM_CLASSES), HIDDEN)
    b3 = uniform(k6, (NUM_CLASSES,), HIDDEN)
    return w1, b1, w2, b2, w3, b3


def reference_forward(feats, w1, b1, w2, b2, w3, b3):
    """Pure-JAX reference mirroring the kernel's bf16-input / f32-accumulate math."""
    bf = jnp.bfloat16
    x = feats.astype(bf)
    h1 = jnp.dot(x, w1.astype(bf), preferred_element_type=jnp.float32) + b1
    h1 = jnp.maximum(h1, 0.0).astype(bf)
    h2 = jnp.dot(h1, w2.astype(bf), preferred_element_type=jnp.float32) + b2
    h2 = jnp.maximum(h2, 0.0).astype(bf)
    return jnp.dot(h2, w3.astype(bf), preferred_element_type=jnp.float32) + b3


if __name__ == "__main__":
    key = jax.random.PRNGKey(0)
    k_feat, k_param = jax.random.split(key)

    # Backbone output features for a batch of 2 images.
    feats = jax.random.normal(k_feat, (2, FEAT_DIM), jnp.float32)
    params_f32 = init_params(k_param)

    # One-time param prep (bf16 + padding) -- NOT repeated per forward call.
    params = prepare_params(*params_f32)

    logits = classifier_forward(feats, *params)
    logits = jax.block_until_ready(logits)

    ref = reference_forward(feats, *params_f32)
    assert logits.shape == (2, NUM_CLASSES)
    # bf16 output writeback -> loosened tolerance vs. the f32-accumulate reference.
    assert jnp.allclose(logits, ref, atol=2e-2, rtol=2e-2), (
        float(jnp.max(jnp.abs(logits - ref))))

    print("KERNEL_OK")
</pallas_src>

<mosaic_0001>
module attributes {stable_mosaic.version = 11 : i64} {
  func.func @_classifier_kernel(%arg0: i32, %arg1: memref<2x1000xf32, #tpu.memory_space<vmem>>, %arg2: memref<1000x512xbf16, #tpu.memory_space<vmem>>, %arg3: memref<1x512xf32, #tpu.memory_space<vmem>>, %arg4: memref<512x512xbf16, #tpu.memory_space<vmem>>, %arg5: memref<1x512xf32, #tpu.memory_space<vmem>>, %arg6: memref<512x128xbf16, #tpu.memory_space<vmem>>, %arg7: memref<1x128xf32, #tpu.memory_space<vmem>>, %arg8: memref<2x128xbf16, #tpu.memory_space<vmem>>) attributes {dimension_semantics = [#tpu.dimension_semantics<parallel>], iteration_bounds = array<i64: 1>, scalar_prefetch = 0 : i64, scratch_operands = 0 : i64, tpu.core_type = #tpu.core_type<tc>, window_params = [{transform_indices = @transform_0, window_bounds = array<i64: 2, 1000>}, {pipeline_mode = #tpu.pipeline_mode<synchronous>, transform_indices = @transform_1, window_bounds = array<i64: 1000, 512>}, {pipeline_mode = #tpu.pipeline_mode<synchronous>, transform_indices = @transform_2, window_bounds = array<i64: 1, 512>}, {pipeline_mode = #tpu.pipeline_mode<synchronous>, transform_indices = @transform_3, window_bounds = array<i64: 512, 512>}, {pipeline_mode = #tpu.pipeline_mode<synchronous>, transform_indices = @transform_4, window_bounds = array<i64: 1, 512>}, {pipeline_mode = #tpu.pipeline_mode<synchronous>, transform_indices = @transform_5, window_bounds = array<i64: 512, 128>}, {pipeline_mode = #tpu.pipeline_mode<synchronous>, transform_indices = @transform_6, window_bounds = array<i64: 1, 128>}, {transform_indices = @transform_7, window_bounds = array<i64: 2, 128>}]} {
    %c0 = arith.constant 0 : index
    %c0_0 = arith.constant 0 : index
    %0 = vector.load %arg1[%c0, %c0_0] : memref<2x1000xf32, #tpu.memory_space<vmem>>, vector<2x1000xf32>
    %1 = arith.truncf %0 : vector<2x1000xf32> to vector<2x1000xbf16>
    %c0_1 = arith.constant 0 : index
    %c0_2 = arith.constant 0 : index
    %2 = vector.load %arg2[%c0_1, %c0_2] : memref<1000x512xbf16, #tpu.memory_space<vmem>>, vector<1000x512xbf16>
    %cst = arith.constant dense<0.000000e+00> : vector<2x512xf32>
    %3 = tpu.matmul %1, %2, %cst {dimension_numbers = #tpu.dot_dimension_numbers<[1], [0], [0], [1], [0, 0, 1, 1], [], []>} : vector<2x1000xbf16>, vector<1000x512xbf16>, vector<2x512xf32> -> vector<2x512xf32>
    %c0_3 = arith.constant 0 : index
    %c0_4 = arith.constant 0 : index
    %4 = vector.load %arg3[%c0_3, %c0_4] : memref<1x512xf32, #tpu.memory_space<vmem>>, vector<1x512xf32>
    %5 = vector.broadcast %4 : vector<1x512xf32> to vector<2x512xf32>
    %6 = arith.addf %3, %5 : vector<2x512xf32>
    %cst_5 = arith.constant 0.000000e+00 : f32
    %7 = vector.broadcast %cst_5 : f32 to vector<2x512xf32>
    %8 = arith.maximumf %6, %7 : vector<2x512xf32>
    %9 = arith.truncf %8 : vector<2x512xf32> to vector<2x512xbf16>
    %c0_6 = arith.constant 0 : index
    %c0_7 = arith.constant 0 : index
    %10 = vector.load %arg4[%c0_6, %c0_7] : memref<512x512xbf16, #tpu.memory_space<vmem>>, vector<512x512xbf16>
    %cst_8 = arith.constant dense<0.000000e+00> : vector<2x512xf32>
    %11 = tpu.matmul %9, %10, %cst_8 {dimension_numbers = #tpu.dot_dimension_numbers<[1], [0], [0], [1], [0, 0, 1, 1], [], []>} : vector<2x512xbf16>, vector<512x512xbf16>, vector<2x512xf32> -> vector<2x512xf32>
    %c0_9 = arith.constant 0 : index
    %c0_10 = arith.constant 0 : index
    %12 = vector.load %arg5[%c0_9, %c0_10] : memref<1x512xf32, #tpu.memory_space<vmem>>, vector<1x512xf32>
    %13 = vector.broadcast %12 : vector<1x512xf32> to vector<2x512xf32>
    %14 = arith.addf %11, %13 : vector<2x512xf32>
    %cst_11 = arith.constant 0.000000e+00 : f32
    %15 = vector.broadcast %cst_11 : f32 to vector<2x512xf32>
    %16 = arith.maximumf %14, %15 : vector<2x512xf32>
    %17 = arith.truncf %16 : vector<2x512xf32> to vector<2x512xbf16>
    %c0_12 = arith.constant 0 : index
    %c0_13 = arith.constant 0 : index
    %18 = vector.load %arg6[%c0_12, %c0_13] : memref<512x128xbf16, #tpu.memory_space<vmem>>, vector<512x128xbf16>
    %cst_14 = arith.constant dense<0.000000e+00> : vector<2x128xf32>
    %19 = tpu.matmul %17, %18, %cst_14 {dimension_numbers = #tpu.dot_dimension_numbers<[1], [0], [0], [1], [0, 0, 1, 1], [], []>} : vector<2x512xbf16>, vector<512x128xbf16>, vector<2x128xf32> -> vector<2x128xf32>
    %c0_15 = arith.constant 0 : index
    %c0_16 = arith.constant 0 : index
    %20 = vector.load %arg7[%c0_15, %c0_16] : memref<1x128xf32, #tpu.memory_space<vmem>>, vector<1x128xf32>
    %21 = vector.broadcast %20 : vector<1x128xf32> to vector<2x128xf32>
    %22 = arith.addf %19, %21 : vector<2x128xf32>
    %23 = arith.truncf %22 : vector<2x128xf32> to vector<2x128xbf16>
    %c0_17 = arith.constant 0 : index
    %c0_18 = arith.constant 0 : index
    %24 = vector.load %arg8[%c0_17, %c0_18] : memref<2x128xbf16, #tpu.memory_space<vmem>>, vector<2x128xbf16>
    tpu.vector_store %arg8[%c0_17, %c0_18], %23 {strides = array<i32>} : memref<2x128xbf16, #tpu.memory_space<vmem>>, vector<2x128xbf16>,
    return
  }
  func.func @transform_0(%arg0: i32) -> (i32, i32) {
    %c0_i32 = arith.constant 0 : i32
    %c0_i32_0 = arith.constant 0 : i32
    return %arg0, %c0_i32 : i32, i32
  }
  func.func @transform_1(%arg0: i32) -> (i32, i32) {
    %c0_i32 = arith.constant 0 : i32
    %c0_i32_0 = arith.constant 0 : i32
    %c0_i32_1 = arith.constant 0 : i32
    return %c0_i32, %c0_i32_0 : i32, i32
  }
  func.func @transform_2(%arg0: i32) -> (i32, i32) {
    %c0_i32 = arith.constant 0 : i32
    %c0_i32_0 = arith.constant 0 : i32
    %c0_i32_1 = arith.constant 0 : i32
    return %c0_i32, %c0_i32_0 : i32, i32
  }
  func.func @transform_3(%arg0: i32) -> (i32, i32) {
    %c0_i32 = arith.constant 0 : i32
    %c0_i32_0 = arith.constant 0 : i32
    %c0_i32_1 = arith.constant 0 : i32
    return %c0_i32, %c0_i32_0 : i32, i32
  }
  func.func @transform_4(%arg0: i32) -> (i32, i32) {
    %c0_i32 = arith.constant 0 : i32
    %c0_i32_0 = arith.constant 0 : i32
    %c0_i32_1 = arith.constant 0 : i32
    return %c0_i32, %c0_i32_0 : i32, i32
  }
  func.func @transform_5(%arg0: i32) -> (i32, i32) {
    %c0_i32 = arith.constant 0 : i32
    %c0_i32_0 = arith.constant 0 : i32
    %c0_i32_1 = arith.constant 0 : i32
    return %c0_i32, %c0_i32_0 : i32, i32
  }
  func.func @transform_6(%arg0: i32) -> (i32, i32) {
    %c0_i32 = arith.constant 0 : i32
    %c0_i32_0 = arith.constant 0 : i32
    %c0_i32_1 = arith.constant 0 : i32
    return %c0_i32, %c0_i32_0 : i32, i32
  }
  func.func @transform_7(%arg0: i32) -> (i32, i32) {
    %c0_i32 = arith.constant 0 : i32
    %c0_i32_0 = arith.constant 0 : i32
    return %arg0, %c0_i32 : i32, i32
  }
}

</mosaic_0001>

<llo_original>
// kernel: classifier_forward.1
$region0: #{classifier_forward.1}
  #allocation0 [shape = 'u32[]', space=smem, size = 0x4, offset = 0x4, fixed_abs, tag = 'smem constant byte address 0x4 - core index']
  #allocation1 [shape = 'u32[144,128]{1,0:T(1,128)}', space=vmem, size = 0x12000, scoped, tag = 'internal scratch']
  %s0 = inlined_call_operand.hbm [shape: f32[2,1000], index: 0, kind: input, shape index: {}]
  %s1 = inlined_call_operand.hbm [shape: bf16[1000,512], index: 1, kind: input, shape index: {}]
  %s2 = inlined_call_operand.hbm [shape: f32[1,512], index: 2, kind: input, shape index: {}]
  %s3 = inlined_call_operand.hbm [shape: bf16[512,512], index: 3, kind: input, shape index: {}]
  %s4 = inlined_call_operand.vmem [shape: f32[1,512], index: 4, kind: input, shape index: {}]
  %s5 = inlined_call_operand.hbm [shape: bf16[512,128], index: 5, kind: input, shape index: {}]
  %s6 = inlined_call_operand.vmem [shape: f32[1,128], index: 6, kind: input, shape index: {}]
  %s7 = inlined_call_operand.vmem [shape: bf16[2,128], index: 7, kind: output, shape index: {}]
  %s8 = sld [smem:[#allocation0]]
  $region58: #{classifier_forward.1} parent=0
    _
  %s10 = ssub.s32 1, %s8
  %s11 = scalar_select 0, %s10, %s8
  $region1: #{classifier_forward.1} parent=0
    #allocation2 [shape = 'u8[8192]{0}', space=vmem, size = 0x2000, scoped, tag = 'input window, operand 0, single buffered']
    #allocation3 [shape = 's32[1]{0}', space=sflag, size = 0x4, scoped, tag = 'scoped memory for classifier_forward.1']
    #allocation4 [shape = 'u8[1024000]{0}', space=vmem, size = 0xfa000, scoped, tag = 'input window, operand 1, single buffered']
    #allocation5 [shape = 's32[1]{0}', space=sflag, size = 0x4, scoped, tag = 'scoped memory for classifier_forward.1']
    #allocation6 [shape = 'u8[2048]{0}', space=vmem, size = 0x800, scoped, tag = 'input window, operand 2, single buffered']
    #allocation7 [shape = 'u8[524288]{0}', space=vmem, size = 0x80000, scoped, tag = 'input window, operand 3, single buffered']
    #allocation8 [shape = 's32[1]{0}', space=sflag, size = 0x4, scoped, tag = 'scoped memory for classifier_forward.1']
    #allocation9 [shape = 'u8[131072]{0}', space=vmem, size = 0x20000, scoped, tag = 'input window, operand 5, single buffered']
    %12 = vsyncpa [#allocation3], 0
    %13 = vsyncpa [#allocation5], 0
    %14 = vsyncpa [#allocation8], 0
    // Predicated region
    $region2: #{classifier_forward.1} parent=1 // pred_check
      _
    $region3: #{classifier_forward.1} parent=1 // pred_check_branch
      %16 = sbr.rel (0) target = $region5
    $region4: #{classifier_forward.1} parent=1 // pred_region
      %s18 = ssub.s32 256, 256
      %19 = vsyncadd [#allocation3], %s18
      %s21 = sshll.u32 [#allocation2], 4
      %s22 = int_to_ptr.vmem [resolvable:$true] %s21
      %24 = dma.hbm_to_vmem [thread:$0]  %s0, 256, %s22, [#allocation3]
    $region5: #{classifier_forward.1} parent=1 // pred_fallthru
      _
    // Predicated region
    $region6: #{classifier_forward.1} parent=1 // pred_check
      _
    $region7: #{classifier_forward.1} parent=1 // pred_check_branch
      %26 = sbr.rel (0) target = $region9
    $region8: #{classifier_forward.1} parent=1 // pred_region
      %s28 = ssub.s32 32000, 32000
      %29 = vsyncadd [#allocation5], %s28
      %s30 = sshll.u32 [#allocation4], 4
      %s31 = int_to_ptr.vmem [resolvable:$true] %s30
      %36 = dma.hbm_to_vmem [thread:$0]  %s1, 32000, %s31, [#allocation5], 256, 256, 16
    $region9: #{classifier_forward.1} parent=1 // pred_fallthru
      _
    // Predicated region
    $region10: #{classifier_forward.1} parent=1 // pred_check
      _
    $region11: #{classifier_forward.1} parent=1 // pred_check_branch
      %38 = sbr.rel (0) target = $region13
    $region12: #{classifier_forward.1} parent=1 // pred_region
      %s40 = ssub.s32 64, 64
      %41 = vsyncadd [#allocation5], %s40
      %s43 = sshll.u32 [#allocation6], 4
      %s44 = int_to_ptr.vmem [resolvable:$true] %s43
      %46 = dma.hbm_to_vmem [thread:$0]  %s2, 64, %s44, [#allocation5]
    $region13: #{classifier_forward.1} parent=1 // pred_fallthru
      _
    // Predicated region
    $region14: #{classifier_forward.1} parent=1 // pred_check
      _
    $region15: #{classifier_forward.1} parent=1 // pred_check_branch
      %48 = sbr.rel (0) target = $region17
    $region16: #{classifier_forward.1} parent=1 // pred_region
      %s50 = ssub.s32 16384, 16384
      %51 = vsyncadd [#allocation8], %s50
      %s52 = sshll.u32 [#allocation7], 4
      %s53 = int_to_ptr.vmem [resolvable:$true] %s52
      %58 = dma.hbm_to_vmem [thread:$0]  %s3, 16384, %s53, [#allocation8], 256, 256, 16
    $region17: #{classifier_forward.1} parent=1 // pred_fallthru
      _
    // Predicated region
    $region18: #{classifier_forward.1} parent=1 // pred_check
      _
    $region19: #{classifier_forward.1} parent=1 // pred_check_branch
      %60 = sbr.rel (0) target = $region21
    $region20: #{classifier_forward.1} parent=1 // pred_region
      _
    $region21: #{classifier_forward.1} parent=1 // pred_fallthru
      _
    // Predicated region
    $region22: #{classifier_forward.1} parent=1 // pred_check
      _
    $region23: #{classifier_forward.1} parent=1 // pred_check_branch
      %62 = sbr.rel (0) target = $region25
    $region24: #{classifier_forward.1} parent=1 // pred_region
      %s64 = ssub.s32 4096, 4096
      %65 = vsyncadd [#allocation8], %s64
      %s66 = sshll.u32 [#allocation9], 4
      %s67 = int_to_ptr.vmem [resolvable:$true] %s66
      %72 = dma.hbm_to_vmem [thread:$0]  %s5, 4096, %s67, [#allocation8], 64, 64, 4
    $region25: #{classifier_forward.1} parent=1 // pred_fallthru
      _
    // Predicated region
    $region26: #{classifier_forward.1} parent=1 // pred_check
      _
    $region27: #{classifier_forward.1} parent=1 // pred_check_branch
      %74 = sbr.rel (0) target = $region29
    $region28: #{classifier_forward.1} parent=1 // pred_region
      _
    $region29: #{classifier_forward.1} parent=1 // pred_fallthru
      _
    // Predicated region
    $region30: #{classifier_forward.1} parent=1 // pred_check
      _
    $region31: #{classifier_forward.1} parent=1 // pred_check_branch
      %76 = sbr.rel (0) target = $region33
    $region32: #{classifier_forward.1} parent=1 // pred_region
      %77 = dma.done [#allocation3], 256
    $region33: #{classifier_forward.1} parent=1 // pred_fallthru
      _
    // Predicated region
    $region34: #{classifier_forward.1} parent=1 // pred_check
      _
    $region35: #{classifier_forward.1} parent=1 // pred_check_branch
      %79 = sbr.rel (0) target = $region37
    $region36: #{classifier_forward.1} parent=1 // pred_region
      %80 = dma.done [#allocation5], 32000
    $region37: #{classifier_forward.1} parent=1 // pred_fallthru
      _
    // Predicated region
    $region38: #{classifier_forward.1} parent=1 // pred_check
      _
    $region39: #{classifier_forward.1} parent=1 // pred_check_branch
      %82 = sbr.rel (0) target = $region41
    $region40: #{classifier_forward.1} parent=1 // pred_region
      %83 = dma.done [#allocation5], 64
    $region41: #{classifier_forward.1} parent=1 // pred_fallthru
      _
    // Predicated region
    $region42: #{classifier_forward.1} parent=1 // pred_check
      _
    $region43: #{classifier_forward.1} parent=1 // pred_check_branch
      %85 = sbr.rel (0) target = $region45
    $region44: #{classifier_forward.1} parent=1 // pred_region
      %86 = dma.done [#allocation8], 16384
    $region45: #{classifier_forward.1} parent=1 // pred_fallthru
      _
    // Predicated region
    $region46: #{classifier_forward.1} parent=1 // pred_check
      _
    $region47: #{classifier_forward.1} parent=1 // pred_check_branch
      %88 = sbr.rel (0) target = $region49
    $region48: #{classifier_forward.1} parent=1 // pred_region
      %89 = dma.done [#allocation8], 4096
    $region49: #{classifier_forward.1} parent=1 // pred_fallthru
      _
    %v91 = vld [vmem:[#allocation2] sm:$0xff]
    %v92 = vld [vmem:[#allocation2 + $0x8] sm:$0xff]
    %v95 = vcombine.high %v91, %v91
    %v97 = vunpack.c.l.s4 1983009808
    %v98 = vunpack.c.0.s8 %v97
    %v99 = vlaneseq
    %v100 = vshrl.u32 %v99, 7
    %v101 = vsub.s32 %v98, %v100
    %v102 = vrot.slane %v91, %v101
    %v104 = vunpack.c.l.s4 1983009808
    %v105 = vunpack.c.0.s8 %v104
    %v106 = vlaneseq
    %v107 = vshrl.u32 %v106, 7
    %v108 = vsub.s32 %v105, %v107
    %v109 = vrot.slane %v95, %v108
    %v110 = vcombine.high %v102, %v102
    %v111 = vcombine.high %v109, %v109
    %v112 = vcombine.high %v92, %v92
    %v114 = vunpack.c.l.s4 1983009808
    %v115 = vunpack.c.0.s8 %v114
    %v116 = vlaneseq
    %v117 = vshrl.u32 %v116, 7
    %v118 = vsub.s32 %v115, %v117
    %v119 = vrot.slane %v92, %v118
    %v121 = vunpack.c.l.s4 1983009808
    %v122 = vunpack.c.0.s8 %v121
    %v123 = vlaneseq
    %v124 = vshrl.u32 %v123, 7
    %v125 = vsub.s32 %v122, %v124
    %v126 = vrot.slane %v112, %v125
    %v127 = vcombine.high %v119, %v119
    %v128 = vcombine.high %v126, %v126
    %v137 = vpack.c.bf16 %v102, %v102
    %v138 = vpack.c.bf16 %v110, %v110
    %v139 = vpack.c.bf16 %v109, %v109
    %v140 = vpack.c.bf16 %v111, %v111
    %v141 = vpack.c.bf16 %v119, %v119
    %v142 = vpack.c.bf16 %v127, %v127
    %v143 = vpack.c.bf16 %v126, %v126
    %v144 = vpack.c.bf16 %v128, %v128
    %v145 = vld [vmem:[#allocation4] sm:$0xff]
    %v146 = vld [vmem:[#allocation4 + $0x8] sm:$0xff]
    %v147 = vld [vmem:[#allocation4 + $0x10] sm:$0xff]
    %v148 = vld [vmem:[#allocation4 + $0x18] sm:$0xff]
    %v149 = vld [vmem:[#allocation4 + $0x20] sm:$0xff]
    %v150 = vld [vmem:[#allocation4 + $0x28] sm:$0xff]
    %v151 = vld [vmem:[#allocation4 + $0x30] sm:$0xff]
    %v152 = vld [vmem:[#allocation4 + $0x38] sm:$0xff]
    %v153 = vld [vmem:[#allocation4 + $0x40] sm:$0xff]
    %v154 = vld [vmem:[#allocation4 + $0x48] sm:$0xff]
    %v155 = vld [vmem:[#allocation4 + $0x50] sm:$0xff]
    %v156 = vld [vmem:[#allocation4 + $0x58] sm:$0xff]
    %v157 = vld [vmem:[#allocation4 + $0x60] sm:$0xff]
    %v158 = vld [vmem:[#allocation4 + $0x68] sm:$0xff]
    %v159 = vld [vmem:[#allocation4 + $0x70] sm:$0xff]
    %v160 = vld [vmem:[#allocation4 + $0x78] sm:$0xff]
    %v161 = vld [vmem:[#allocation4 + $0x80] sm:$0xff]
    %v162 = vld [vmem:[#allocation4 + $0x88] sm:$0xff]
    %v163 = vld [vmem:[#allocation4 + $0x90] sm:$0xff]
    %v164 = vld [vmem:[#allocation4 + $0x98] sm:$0xff]
    %v165 = vld [vmem:[#allocation4 + $0xa0] sm:$0xff]
    %v166 = vld [vmem:[#allocation4 + $0xa8] sm:$0xff]
    %v167 = vld [vmem:[#allocation4 + $0xb0] sm:$0xff]
    %v168 = vld [vmem:[#allocation4 + $0xb8] sm:$0xff]
    %v169 = vld [vmem:[#allocation4 + $0xc0] sm:$0xff]
    %v170 = vld [vmem:[#allocation4 + $0xc8] sm:$0xff]
    %v171 = vld [vmem:[#allocation4 + $0xd0] sm:$0xff]
    %v172 = vld [vmem:[#allocation4 + $0xd8] sm:$0xff]
    %v173 = vld [vmem:[#allocation4 + $0xe0] sm:$0xff]
    %v174 = vld [vmem:[#allocation4 + $0xe8] sm:$0xff]
    %v175 = vld [vmem:[#allocation4 + $0xf0] sm:$0xff]
    %v176 = vld [vmem:[#allocation4 + $0xf8] sm:$0xff]
    %v177 = vld [vmem:[#allocation4 + $0x100] sm:$0xff]
    %v178 = vld [vmem:[#allocation4 + $0x108] sm:$0xff]
    %v179 = vld [vmem:[#allocation4 + $0x110] sm:$0xff]
    %v180 = vld [vmem:[#allocation4 + $0x118] sm:$0xff]
    %v181 = vld [vmem:[#allocation4 + $0x120] sm:$0xff]
    %v182 = vld [vmem:[#allocation4 + $0x128] sm:$0xff]
    %v183 = vld [vmem:[#allocation4 + $0x130] sm:$0xff]
    %v184 = vld [vmem:[#allocation4 + $0x138] sm:$0xff]
    %v185 = vld [vmem:[#allocation4 + $0x140] sm:$0xff]
    %v186 = vld [vmem:[#allocation4 + $0x148] sm:$0xff]
    %v187 = vld [vmem:[#allocation4 + $0x150] sm:$0xff]
    %v188 = vld [vmem:[#allocation4 + $0x158] sm:$0xff]
    %v189 = vld [vmem:[#allocation4 + $0x160] sm:$0xff]
    %v190 = vld [vmem:[#allocation4 + $0x168] sm:$0xff]
    %v191 = vld [vmem:[#allocation4 + $0x170] sm:$0xff]
    %v192 = vld [vmem:[#allocation4 + $0x178] sm:$0xff]
    %v193 = vld [vmem:[#allocation4 + $0x180] sm:$0xff]
    %v194 = vld [vmem:[#allocation4 + $0x188] sm:$0xff]
    %v195 = vld [vmem:[#allocation4 + $0x190] sm:$0xff]
    %v196 = vld [vmem:[#allocation4 + $0x198] sm:$0xff]
    %v197 = vld [vmem:[#allocation4 + $0x1a0] sm:$0xff]
    %v198 = vld [vmem:[#allocation4 + $0x1a8] sm:$0xff]
    %v199 = vld [vmem:[#allocation4 + $0x1b0] sm:$0xff]
    %v200 = vld [vmem:[#allocation4 + $0x1b8] sm:$0xff]
    %v201 = vld [vmem:[#allocation4 + $0x1c0] sm:$0xff]
    %v202 = vld [vmem:[#allocation4 + $0x1c8] sm:$0xff]
    %v203 = vld [vmem:[#allocation4 + $0x1d0] sm:$0xff]
    %v204 = vld [vmem:[#allocation4 + $0x1d8] sm:$0xff]
    %v205 = vld [vmem:[#allocation4 + $0x1e0] sm:$0xff]
    %v206 = vld [vmem:[#allocation4 + $0x1e8] sm:$0xff]
    %v207 = vld [vmem:[#allocation4 + $0x1f0] sm:$0xff]
    %v208 = vld [vmem:[#allocation4 + $0x1f8] sm:$0xff]
    %v209 = vld [vmem:[#allocation4 + $0x200] sm:$0xff]
    %v210 = vld [vmem:[#allocation4 + $0x208] sm:$0xff]
    %v211 = vld [vmem:[#allocation4 + $0x210] sm:$0xff]
    %v212 = vld [vmem:[#allocation4 + $0x218] sm:$0xff]
    %v213 = vld [vmem:[#allocation4 + $0x220] sm:$0xff]
    %v214 = vld [vmem:[#allocation4 + $0x228] sm:$0xff]
    %v215 = vld [vmem:[#allocation4 + $0x230] sm:$0xff]
    %v216 = vld [vmem:[#allocation4 + $0x238] sm:$0xff]
    %v217 = vld [vmem:[#allocation4 + $0x240] sm:$0xff]
    %v218 = vld [vmem:[#allocation4 + $0x248] sm:$0xff]
    %v219 = vld [vmem:[#allocation4 + $0x250] sm:$0xff]
    %v220 = vld [vmem:[#allocation4 + $0x258] sm:$0xff]
    %v221 = vld [vmem:[#allocation4 + $0x260] sm:$0xff]
    %v222 = vld [vmem:[#allocation4 + $0x268] sm:$0xff]
    %v223 = vld [vmem:[#allocation4 + $0x270] sm:$0xff]
    %v224 = vld [vmem:[#allocation4 + $0x278] sm:$0xff]
    %v225 = vld [vmem:[#allocation4 + $0x280] sm:$0xff]
    %v226 = vld [vmem:[#allocation4 + $0x288] sm:$0xff]
    %v227 = vld [vmem:[#allocation4 + $0x290] sm:$0xff]
    %v228 = vld [vmem:[#allocation4 + $0x298] sm:$0xff]
    %v229 = vld [vmem:[#allocation4 + $0x2a0] sm:$0xff]
    %v230 = vld [vmem:[#allocation4 + $0x2a8] sm:$0xff]
    %v231 = vld [vmem:[#allocation4 + $0x2b0] sm:$0xff]
    %v232 = vld [vmem:[#allocation4 + $0x2b8] sm:$0xff]
    %v233 = vld [vmem:[#allocation4 + $0x2c0] sm:$0xff]
    %v234 = vld [vmem:[#allocation4 + $0x2c8] sm:$0xff]
    %v235 = vld [vmem:[#allocation4 + $0x2d0] sm:$0xff]
    %v236 = vld [vmem:[#allocation4 + $0x2d8] sm:$0xff]
    %v237 = vld [vmem:[#allocation4 + $0x2e0] sm:$0xff]
    %v238 = vld [vmem:[#allocation4 + $0x2e8] sm:$0xff]
    %v239 = vld [vmem:[#allocation4 + $0x2f0] sm:$0xff]
    %v240 = vld [vmem:[#allocation4 + $0x2f8] sm:$0xff]
    %v241 = vld [vmem:[#allocation4 + $0x300] sm:$0xff]
    %v242 = vld [vmem:[#allocation4 + $0x308] sm:$0xff]
    %v243 = vld [vmem:[#allocation4 + $0x310] sm:$0xff]
    %v244 = vld [vmem:[#allocation4 + $0x318] sm:$0xff]
    %v245 = vld [vmem:[#allocation4 + $0x320] sm:$0xff]
    %v246 = vld [vmem:[#allocation4 + $0x328] sm:$0xff]
    %v247 = vld [vmem:[#allocation4 + $0x330] sm:$0xff]
    %v248 = vld [vmem:[#allocation4 + $0x338] sm:$0xff]
    %v249 = vld [vmem:[#allocation4 + $0x340] sm:$0xff]
    %v250 = vld [vmem:[#allocation4 + $0x348] sm:$0xff]
    %v251 = vld [vmem:[#allocation4 + $0x350] sm:$0xff]
    %v252 = vld [vmem:[#allocation4 + $0x358] sm:$0xff]
    %v253 = vld [vmem:[#allocation4 + $0x360] sm:$0xff]
    %v254 = vld [vmem:[#allocation4 + $0x368] sm:$0xff]
    %v255 = vld [vmem:[#allocation4 + $0x370] sm:$0xff]
    %v256 = vld [vmem:[#allocation4 + $0x378] sm:$0xff]
    %v257 = vld [vmem:[#allocation4 + $0x380] sm:$0xff]
    %v258 = vld [vmem:[#allocation4 + $0x388] sm:$0xff]
    %v259 = vld [vmem:[#allocation4 + $0x390] sm:$0xff]
    %v260 = vld [vmem:[#allocation4 + $0x398] sm:$0xff]
    %v261 = vld [vmem:[#allocation4 + $0x3a0] sm:$0xff]
    %v262 = vld [vmem:[#allocation4 + $0x3a8] sm:$0xff]
    %v263 = vld [vmem:[#allocation4 + $0x3b0] sm:$0xff]
    %v264 = vld [vmem:[#allocation4 + $0x3b8] sm:$0xff]
    %v265 = vld [vmem:[#allocation4 + $0x3c0] sm:$0xff]
    %v266 = vld [vmem:[#allocation4 + $0x3c8] sm:$0xff]
    %v267 = vld [vmem:[#allocation4 + $0x3d0] sm:$0xff]
    %v268 = vld [vmem:[#allocation4 + $0x3d8] sm:$0xff]
    %v269 = vld [vmem:[#allocation4 + $0x3e0] sm:$0xff]
    %v270 = vld [vmem:[#allocation4 + $0x3e8] sm:$0xff]
    %v271 = vld [vmem:[#allocation4 + $0x3f0] sm:$0xff]
    %v272 = vld [vmem:[#allocation4 + $0x3f8] sm:$0xff]
    %v273 = vld [vmem:[#allocation4 + $0x400] sm:$0xff]
    %v274 = vld [vmem:[#allocation4 + $0x408] sm:$0xff]
    %v275 = vld [vmem:[#allocation4 + $0x410] sm:$0xff]
    %v276 = vld [vmem:[#allocation4 + $0x418] sm:$0xff]
    %v277 = vld [vmem:[#allocation4 + $0x420] sm:$0xff]
    %v278 = vld [vmem:[#allocation4 + $0x428] sm:$0xff]
    %v279 = vld [vmem:[#allocation4 + $0x430] sm:$0xff]
    %v280 = vld [vmem:[#allocation4 + $0x438] sm:$0xff]
    %v281 = vld [vmem:[#allocation4 + $0x440] sm:$0xff]
    %v282 = vld [vmem:[#allocation4 + $0x448] sm:$0xff]
    %v283 = vld [vmem:[#allocation4 + $0x450] sm:$0xff]
    %v284 = vld [vmem:[#allocation4 + $0x458] sm:$0xff]
    %v285 = vld [vmem:[#allocation4 + $0x460] sm:$0xff]
    %v286 = vld [vmem:[#allocation4 + $0x468] sm:$0xff]
    %v287 = vld [vmem:[#allocation4 + $0x470] sm:$0xff]
    %v288 = vld [vmem:[#allocation4 + $0x478] sm:$0xff]
    %v289 = vld [vmem:[#allocation4 + $0x480] sm:$0xff]
    %v290 = vld [vmem:[#allocation4 + $0x488] sm:$0xff]
    %v291 = vld [vmem:[#allocation4 + $0x490] sm:$0xff]
    %v292 = vld [vmem:[#allocation4 + $0x498] sm:$0xff]
    %v293 = vld [vmem:[#allocation4 + $0x4a0] sm:$0xff]
    %v294 = vld [vmem:[#allocation4 + $0x4a8] sm:$0xff]
    %v295 = vld [vmem:[#allocation4 + $0x4b0] sm:$0xff]
    %v296 = vld [vmem:[#allocation4 + $0x4b8] sm:$0xff]
    %v297 = vld [vmem:[#allocation4 + $0x4c0] sm:$0xff]
    %v298 = vld [vmem:[#allocation4 + $0x4c8] sm:$0xff]
    %v299 = vld [vmem:[#allocation4 + $0x4d0] sm:$0xff]
    %v300 = vld [vmem:[#allocation4 + $0x4d8] sm:$0xff]
    %v301 = vld [vmem:[#allocation4 + $0x4e0] sm:$0xff]
    %v302 = vld [vmem:[#allocation4 + $0x4e8] sm:$0xff]
    %v303 = vld [vmem:[#allocation4 + $0x4f0] sm:$0xff]
    %v304 = vld [vmem:[#allocation4 + $0x4f8] sm:$0xff]
    %v305 = vld [vmem:[#allocation4 + $0x500] sm:$0xff]
    %v306 = vld [vmem:[#allocation4 + $0x508] sm:$0xff]
    %v307 = vld [vmem:[#allocation4 + $0x510] sm:$0xff]
    %v308 = vld [vmem:[#allocation4 + $0x518] sm:$0xff]
    %v309 = vld [vmem:[#allocation4 + $0x520] sm:$0xff]
    %v310 = vld [vmem:[#allocation4 + $0x528] sm:$0xff]
    %v311 = vld [vmem:[#allocation4 + $0x530] sm:$0xff]
    %v312 = vld [vmem:[#allocation4 + $0x538] sm:$0xff]
    %v313 = vld [vmem:[#allocation4 + $0x540] sm:$0xff]
    %v314 = vld [vmem:[#allocation4 + $0x548] sm:$0xff]
    %v315 = vld [vmem:[#allocation4 + $0x550] sm:$0xff]
    %v316 = vld [vmem:[#allocation4 + $0x558] sm:$0xff]
    %v317 = vld [vmem:[#allocation4 + $0x560] sm:$0xff]
    %v318 = vld [vmem:[#allocation4 + $0x568] sm:$0xff]
    %v319 = vld [vmem:[#allocation4 + $0x570] sm:$0xff]
    %v320 = vld [vmem:[#allocation4 + $0x578] sm:$0xff]
    %v321 = vld [vmem:[#allocation4 + $0x580] sm:$0xff]
    %v322 = vld [vmem:[#allocation4 + $0x588] sm:$0xff]
    %v323 = vld [vmem:[#allocation4 + $0x590] sm:$0xff]
    %v324 = vld [vmem:[#allocation4 + $0x598] sm:$0xff]
    %v325 = vld [vmem:[#allocation4 + $0x5a0] sm:$0xff]
    %v326 = vld [vmem:[#allocation4 + $0x5a8] sm:$0xff]
    %v327 = vld [vmem:[#allocation4 + $0x5b0] sm:$0xff]
    %v328 = vld [vmem:[#allocation4 + $0x5b8] sm:$0xff]
    %v329 = vld [vmem:[#allocation4 + $0x5c0] sm:$0xff]
    %v330 = vld [vmem:[#allocation4 + $0x5c8] sm:$0xff]
    %v331 = vld [vmem:[#allocation4 + $0x5d0] sm:$0xff]
    %v332 = vld [vmem:[#allocation4 + $0x5d8] sm:$0xff]
    %v333 = vld [vmem:[#allocation4 + $0x5e0] sm:$0xff]
    %v334 = vld [vmem:[#allocation4 + $0x5e8] sm:$0xff]
    %v335 = vld [vmem:[#allocation4 + $0x5f0] sm:$0xff]
    %v336 = vld [vmem:[#allocation4 + $0x5f8] sm:$0xff]
    %v337 = vld [vmem:[#allocation4 + $0x600] sm:$0xff]
    %v338 = vld [vmem:[#allocation4 + $0x608] sm:$0xff]
    %v339 = vld [vmem:[#allocation4 + $0x610] sm:$0xff]
    %v340 = vld [vmem:[#allocation4 + $0x618] sm:$0xff]
    %v341 = vld [vmem:[#allocation4 + $0x620] sm:$0xff]
    %v342 = vld [vmem:[#allocation4 + $0x628] sm:$0xff]
    %v343 = vld [vmem:[#allocation4 + $0x630] sm:$0xff]
    %v344 = vld [vmem:[#allocation4 + $0x638] sm:$0xff]
    %v345 = vld [vmem:[#allocation4 + $0x640] sm:$0xff]
    %v346 = vld [vmem:[#allocation4 + $0x648] sm:$0xff]
    %v347 = vld [vmem:[#allocation4 + $0x650] sm:$0xff]
    %v348 = vld [vmem:[#allocation4 + $0x658] sm:$0xff]
    %v349 = vld [vmem:[#allocation4 + $0x660] sm:$0xff]
    %v350 = vld [vmem:[#allocation4 + $0x668] sm:$0xff]
    %v351 = vld [vmem:[#allocation4 + $0x670] sm:$0xff]
    %v352 = vld [vmem:[#allocation4 + $0x678] sm:$0xff]
    %v353 = vld [vmem:[#allocation4 + $0x680] sm:$0xff]
    %v354 = vld [vmem:[#allocation4 + $0x688] sm:$0xff]
    %v355 = vld [vmem:[#allocation4 + $0x690] sm:$0xff]
    %v356 = vld [vmem:[#allocation4 + $0x698] sm:$0xff]
    %v357 = vld [vmem:[#allocation4 + $0x6a0] sm:$0xff]
    %v358 = vld [vmem:[#allocation4 + $0x6a8] sm:$0xff]
    %v359 = vld [vmem:[#allocation4 + $0x6b0] sm:$0xff]
    %v360 = vld [vmem:[#allocation4 + $0x6b8] sm:$0xff]
    %v361 = vld [vmem:[#allocation4 + $0x6c0] sm:$0xff]
    %v362 = vld [vmem:[#allocation4 + $0x6c8] sm:$0xff]
    %v363 = vld [vmem:[#allocation4 + $0x6d0] sm:$0xff]
    %v364 = vld [vmem:[#allocation4 + $0x6d8] sm:$0xff]
    %v365 = vld [vmem:[#allocation4 + $0x6e0] sm:$0xff]
    %v366 = vld [vmem:[#allocation4 + $0x6e8] sm:$0xff]
    %v367 = vld [vmem:[#allocation4 + $0x6f0] sm:$0xff]
    %v368 = vld [vmem:[#allocation4 + $0x6f8] sm:$0xff]
    %v369 = vld [vmem:[#allocation4 + $0x700] sm:$0xff]
    %v370 = vld [vmem:[#allocation4 + $0x708] sm:$0xff]
    %v371 = vld [vmem:[#allocation4 + $0x710] sm:$0xff]
    %v372 = vld [vmem:[#allocation4 + $0x718] sm:$0xff]
    %v373 = vld [vmem:[#allocation4 + $0x720] sm:$0xff]
    %v374 = vld [vmem:[#allocation4 + $0x728] sm:$0xff]
    %v375 = vld [vmem:[#allocation4 + $0x730] sm:$0xff]
    %v376 = vld [vmem:[#allocation4 + $0x738] sm:$0xff]
    %v377 = vld [vmem:[#allocation4 + $0x740] sm:$0xff]
    %v378 = vld [vmem:[#allocation4 + $0x748] sm:$0xff]
    %v379 = vld [vmem:[#allocation4 + $0x750] sm:$0xff]
    %v380 = vld [vmem:[#allocation4 + $0x758] sm:$0xff]
    %v381 = vld [vmem:[#allocation4 + $0x760] sm:$0xff]
    %v382 = vld [vmem:[#allocation4 + $0x768] sm:$0xff]
    %v383 = vld [vmem:[#allocation4 + $0x770] sm:$0xff]
    %v384 = vld [vmem:[#allocation4 + $0x778] sm:$0xff]
    %v385 = vld [vmem:[#allocation4 + $0x780] sm:$0xff]
    %v386 = vld [vmem:[#allocation4 + $0x788] sm:$0xff]
    %v387 = vld [vmem:[#allocation4 + $0x790] sm:$0xff]
    %v388 = vld [vmem:[#allocation4 + $0x798] sm:$0xff]
    %v389 = vld [vmem:[#allocation4 + $0x7a0] sm:$0xff]
    %v390 = vld [vmem:[#allocation4 + $0x7a8] sm:$0xff]
    %v391 = vld [vmem:[#allocation4 + $0x7b0] sm:$0xff]
    %v392 = vld [vmem:[#allocation4 + $0x7b8] sm:$0xff]
    %v393 = vld [vmem:[#allocation4 + $0x7c0] sm:$0xff]
    %v394 = vld [vmem:[#allocation4 + $0x7c8] sm:$0xff]
    %v395 = vld [vmem:[#allocation6] sm:$0xf]
    %v397 = vlaneseq
    %v398 = vshrl.u32 %v397, 7
    %v399 = vsub.s32 0, %v398
    %v400 = vrot.slane %v395, %v399
    %v401 = vlaneseq
    %v402 = vshrl.u32 %v401, 7
    %v403 = vsub.s32 1, %v402
    %v404 = vrot.slane %v395, %v403
    %v405 = vlaneseq
    %v406 = vshrl.u32 %v405, 7
    %v407 = vsub.s32 2, %v406
    %v408 = vrot.slane %v395, %v407
    %v409 = vlaneseq
    %v410 = vshrl.u32 %v409, 7
    %v411 = vsub.s32 3, %v410
    %v412 = vrot.slane %v395, %v411
    %v667 = vunpack.c.l.b16 %v145
    %v668 = vunpack.c.h.b16 %v145
    %v669 = vunpack.c.l.b16 %v146
    %v670 = vunpack.c.h.b16 %v146
    %v671 = vunpack.c.l.b16 %v147
    %v672 = vunpack.c.h.b16 %v147
    %v673 = vunpack.c.l.b16 %v148
    %v674 = vunpack.c.h.b16 %v148
    %v675 = vunpack.c.l.b16 %v149
    %v676 = vunpack.c.h.b16 %v149
    %v677 = vunpack.c.l.b16 %v150
    %v678 = vunpack.c.h.b16 %v150
    %v679 = vunpack.c.l.b16 %v151
    %v680 = vunpack.c.h.b16 %v151
    %v681 = vunpack.c.l.b16 %v152
    %v682 = vunpack.c.h.b16 %v152
    %v683 = vunpack.c.l.b16 %v153
    %v684 = vunpack.c.h.b16 %v153
    %v685 = vunpack.c.l.b16 %v154
    %v686 = vunpack.c.h.b16 %v154
    %v687 = vunpack.c.l.b16 %v155
    %v688 = vunpack.c.h.b16 %v155
    %v689 = vunpack.c.l.b16 %v156
    %v690 = vunpack.c.h.b16 %v156
    %v691 = vunpack.c.l.b16 %v157
    %v692 = vunpack.c.h.b16 %v157
    %v693 = vunpack.c.l.b16 %v158
    %v694 = vunpack.c.h.b16 %v158
    %v695 = vunpack.c.l.b16 %v159
    %v696 = vunpack.c.h.b16 %v159
    %v697 = vunpack.c.l.b16 %v160
    %v698 = vunpack.c.h.b16 %v160
    %v699 = vunpack.c.l.b16 %v161
    %v700 = vunpack.c.h.b16 %v161
    %v701 = vunpack.c.l.b16 %v162
    %v702 = vunpack.c.h.b16 %v162
    %v703 = vunpack.c.l.b16 %v163
    %v704 = vunpack.c.h.b16 %v163
    %v705 = vunpack.c.l.b16 %v164
    %v706 = vunpack.c.h.b16 %v164
    %v707 = vunpack.c.l.b16 %v165
    %v708 = vunpack.c.h.b16 %v165
    %v709 = vunpack.c.l.b16 %v166
    %v710 = vunpack.c.h.b16 %v166
    %v711 = vunpack.c.l.b16 %v167
    %v712 = vunpack.c.h.b16 %v167
    %v713 = vunpack.c.l.b16 %v168
    %v714 = vunpack.c.h.b16 %v168
    %v715 = vunpack.c.l.b16 %v169
    %v716 = vunpack.c.h.b16 %v169
    %v717 = vunpack.c.l.b16 %v170
    %v718 = vunpack.c.h.b16 %v170
    %v719 = vunpack.c.l.b16 %v171
    %v720 = vunpack.c.h.b16 %v171
    %v721 = vunpack.c.l.b16 %v172
    %v722 = vunpack.c.h.b16 %v172
    %v723 = vunpack.c.l.b16 %v173
    %v724 = vunpack.c.h.b16 %v173
    %v725 = vunpack.c.l.b16 %v174
    %v726 = vunpack.c.h.b16 %v174
    %v727 = vunpack.c.l.b16 %v175
    %v728 = vunpack.c.h.b16 %v175
    %v729 = vunpack.c.l.b16 %v176
    %v730 = vunpack.c.h.b16 %v176
    %v731 = vunpack.c.l.b16 %v177
    %v732 = vunpack.c.h.b16 %v177
    %v733 = vunpack.c.l.b16 %v178
    %v734 = vunpack.c.h.b16 %v178
    %v735 = vunpack.c.l.b16 %v179
    %v736 = vunpack.c.h.b16 %v179
    %v737 = vunpack.c.l.b16 %v180
    %v738 = vunpack.c.h.b16 %v180
    %v739 = vunpack.c.l.b16 %v181
    %v740 = vunpack.c.h.b16 %v181
    %v741 = vunpack.c.l.b16 %v182
    %v742 = vunpack.c.h.b16 %v182
    %v743 = vunpack.c.l.b16 %v183
    %v744 = vunpack.c.h.b16 %v183
    %v745 = vunpack.c.l.b16 %v184
    %v746 = vunpack.c.h.b16 %v184
    %v747 = vunpack.c.l.b16 %v185
    %v748 = vunpack.c.h.b16 %v185
    %v749 = vunpack.c.l.b16 %v186
    %v750 = vunpack.c.h.b16 %v186
    %v751 = vunpack.c.l.b16 %v187
    %v752 = vunpack.c.h.b16 %v187
    %v753 = vunpack.c.l.b16 %v188
    %v754 = vunpack.c.h.b16 %v188
    %v755 = vunpack.c.l.b16 %v189
    %v756 = vunpack.c.h.b16 %v189
    %v757 = vunpack.c.l.b16 %v190
    %v758 = vunpack.c.h.b16 %v190
    %v759 = vunpack.c.l.b16 %v191
    %v760 = vunpack.c.h.b16 %v191
    %v761 = vunpack.c.l.b16 %v192
    %v762 = vunpack.c.h.b16 %v192
    %v763 = vunpack.c.l.b16 %v193
    %v764 = vunpack.c.h.b16 %v193
    %v765 = vunpack.c.l.b16 %v194
    %v766 = vunpack.c.h.b16 %v194
    %v767 = vunpack.c.l.b16 %v195
    %v768 = vunpack.c.h.b16 %v195
    %v769 = vunpack.c.l.b16 %v196
    %v770 = vunpack.c.h.b16 %v196
    %v771 = vunpack.c.l.b16 %v197
    %v772 = vunpack.c.h.b16 %v197
    %v773 = vunpack.c.l.b16 %v198
    %v774 = vunpack.c.h.b16 %v198
    %v775 = vunpack.c.l.b16 %v199
    %v776 = vunpack.c.h.b16 %v199
    %v777 = vunpack.c.l.b16 %v200
    %v778 = vunpack.c.h.b16 %v200
    %v779 = vunpack.c.l.b16 %v201
    %v780 = vunpack.c.h.b16 %v201
    %v781 = vunpack.c.l.b16 %v202
    %v782 = vunpack.c.h.b16 %v202
    %v783 = vunpack.c.l.b16 %v203
    %v784 = vunpack.c.h.b16 %v203
    %v785 = vunpack.c.l.b16 %v204
    %v786 = vunpack.c.h.b16 %v204
    %v787 = vunpack.c.l.b16 %v205
    %v788 = vunpack.c.h.b16 %v205
    %v789 = vunpack.c.l.b16 %v206
    %v790 = vunpack.c.h.b16 %v206
    %v791 = vunpack.c.l.b16 %v207
    %v792 = vunpack.c.h.b16 %v207
    %v793 = vunpack.c.l.b16 %v208
    %v794 = vunpack.c.h.b16 %v208
    %v795 = vunpack.c.l.b16 %v209
    %v796 = vunpack.c.h.b16 %v209
    %v797 = vunpack.c.l.b16 %v210
    %v798 = vunpack.c.h.b16 %v210
    %v799 = vunpack.c.l.b16 %v211
    %v800 = vunpack.c.h.b16 %v211
    %v801 = vunpack.c.l.b16 %v212
    %v802 = vunpack.c.h.b16 %v212
    %v803 = vunpack.c.l.b16 %v213
    %v804 = vunpack.c.h.b16 %v213
    %v805 = vunpack.c.l.b16 %v214
    %v806 = vunpack.c.h.b16 %v214
    %v807 = vunpack.c.l.b16 %v215
    %v808 = vunpack.c.h.b16 %v215
    %v809 = vunpack.c.l.b16 %v216
    %v810 = vunpack.c.h.b16 %v216
    %v811 = vunpack.c.l.b16 %v217
    %v812 = vunpack.c.h.b16 %v217
    %v813 = vunpack.c.l.b16 %v218
    %v814 = vunpack.c.h.b16 %v218
    %v815 = vunpack.c.l.b16 %v219
    %v816 = vunpack.c.h.b16 %v219
    %v817 = vunpack.c.l.b16 %v220
    %v818 = vunpack.c.h.b16 %v220
    %v819 = vunpack.c.l.b16 %v221
    %v820 = vunpack.c.h.b16 %v221
    %v821 = vunpack.c.l.b16 %v222
    %v822 = vunpack.c.h.b16 %v222
    %v823 = vunpack.c.l.b16 %v223
    %v824 = vunpack.c.h.b16 %v223
    %v825 = vunpack.c.l.b16 %v224
    %v826 = vunpack.c.h.b16 %v224
    %v827 = vunpack.c.l.b16 %v225
    %v828 = vunpack.c.h.b16 %v225
    %v829 = vunpack.c.l.b16 %v226
    %v830 = vunpack.c.h.b16 %v226
    %v831 = vunpack.c.l.b16 %v227
    %v832 = vunpack.c.h.b16 %v227
    %v833 = vunpack.c.l.b16 %v228
    %v834 = vunpack.c.h.b16 %v228
    %v835 = vunpack.c.l.b16 %v229
    %v836 = vunpack.c.h.b16 %v229
    %v837 = vunpack.c.l.b16 %v230
    %v838 = vunpack.c.h.b16 %v230
    %v839 = vunpack.c.l.b16 %v231
    %v840 = vunpack.c.h.b16 %v231
    %v841 = vunpack.c.l.b16 %v232
    %v842 = vunpack.c.h.b16 %v232
    %v843 = vunpack.c.l.b16 %v233
    %v844 = vunpack.c.h.b16 %v233
    %v845 = vunpack.c.l.b16 %v234
    %v846 = vunpack.c.h.b16 %v234
    %v847 = vunpack.c.l.b16 %v235
    %v848 = vunpack.c.h.b16 %v235
    %v849 = vunpack.c.l.b16 %v236
    %v850 = vunpack.c.h.b16 %v236
    %v851 = vunpack.c.l.b16 %v237
    %v852 = vunpack.c.h.b16 %v237
    %v853 = vunpack.c.l.b16 %v238
    %v854 = vunpack.c.h.b16 %v238
    %v855 = vunpack.c.l.b16 %v239
    %v856 = vunpack.c.h.b16 %v239
    %v857 = vunpack.c.l.b16 %v240
    %v858 = vunpack.c.h.b16 %v240
    %v859 = vunpack.c.l.b16 %v241
    %v860 = vunpack.c.h.b16 %v241
    %v861 = vunpack.c.l.b16 %v242
    %v862 = vunpack.c.h.b16 %v242
    %v863 = vunpack.c.l.b16 %v243
    %v864 = vunpack.c.h.b16 %v243
    %v865 = vunpack.c.l.b16 %v244
    %v866 = vunpack.c.h.b16 %v244
    %v867 = vunpack.c.l.b16 %v245
    %v868 = vunpack.c.h.b16 %v245
    %v869 = vunpack.c.l.b16 %v246
    %v870 = vunpack.c.h.b16 %v246
    %v871 = vunpack.c.l.b16 %v247
    %v872 = vunpack.c.h.b16 %v247
    %v873 = vunpack.c.l.b16 %v248
    %v874 = vunpack.c.h.b16 %v248
    %v875 = vunpack.c.l.b16 %v249
    %v876 = vunpack.c.h.b16 %v249
    %v877 = vunpack.c.l.b16 %v250
    %v878 = vunpack.c.h.b16 %v250
    %v879 = vunpack.c.l.b16 %v251
    %v880 = vunpack.c.h.b16 %v251
    %v881 = vunpack.c.l.b16 %v252
    %v882 = vunpack.c.h.b16 %v252
    %v883 = vunpack.c.l.b16 %v253
    %v884 = vunpack.c.h.b16 %v253
    %v885 = vunpack.c.l.b16 %v254
    %v886 = vunpack.c.h.b16 %v254
    %v887 = vunpack.c.l.b16 %v255
    %v888 = vunpack.c.h.b16 %v255
    %v889 = vunpack.c.l.b16 %v256
    %v890 = vunpack.c.h.b16 %v256
    %v891 = vunpack.c.l.b16 %v257
    %v892 = vunpack.c.h.b16 %v257
    %v893 = vunpack.c.l.b16 %v258
    %v894 = vunpack.c.h.b16 %v258
    %v895 = vunpack.c.l.b16 %v259
    %v896 = vunpack.c.h.b16 %v259
    %v897 = vunpack.c.l.b16 %v260
    %v898 = vunpack.c.h.b16 %v260
    %v899 = vunpack.c.l.b16 %v261
    %v900 = vunpack.c.h.b16 %v261
    %v901 = vunpack.c.l.b16 %v262
    %v902 = vunpack.c.h.b16 %v262
    %v903 = vunpack.c.l.b16 %v263
    %v904 = vunpack.c.h.b16 %v263
    %v905 = vunpack.c.l.b16 %v264
    %v906 = vunpack.c.h.b16 %v264
    %v907 = vunpack.c.l.b16 %v265
    %v908 = vunpack.c.h.b16 %v265
    %v909 = vunpack.c.l.b16 %v266
    %v910 = vunpack.c.h.b16 %v266
    %v911 = vunpack.c.l.b16 %v267
    %v912 = vunpack.c.h.b16 %v267
    %v913 = vunpack.c.l.b16 %v268
    %v914 = vunpack.c.h.b16 %v268
    %v915 = vunpack.c.l.b16 %v269
    %v916 = vunpack.c.h.b16 %v269
    %v917 = vunpack.c.l.b16 %v270
    %v918 = vunpack.c.h.b16 %v270
    %v919 = vunpack.c.l.b16 %v271
    %v920 = vunpack.c.h.b16 %v271
    %v921 = vunpack.c.l.b16 %v272
    %v922 = vunpack.c.h.b16 %v272
    %v923 = vunpack.c.l.b16 %v273
    %v924 = vunpack.c.h.b16 %v273
    %v925 = vunpack.c.l.b16 %v274
    %v926 = vunpack.c.h.b16 %v274
    %v927 = vunpack.c.l.b16 %v275
    %v928 = vunpack.c.h.b16 %v275
    %v929 = vunpack.c.l.b16 %v276
    %v930 = vunpack.c.h.b16 %v276
    %v931 = vunpack.c.l.b16 %v277
    %v932 = vunpack.c.h.b16 %v277
    %v933 = vunpack.c.l.b16 %v278
    %v934 = vunpack.c.h.b16 %v278
    %v935 = vunpack.c.l.b16 %v279
    %v936 = vunpack.c.h.b16 %v279
    %v937 = vunpack.c.l.b16 %v280
    %v938 = vunpack.c.h.b16 %v280
    %v939 = vunpack.c.l.b16 %v281
    %v940 = vunpack.c.h.b16 %v281
    %v941 = vunpack.c.l.b16 %v282
    %v942 = vunpack.c.h.b16 %v282
    %v943 = vunpack.c.l.b16 %v283
    %v944 = vunpack.c.h.b16 %v283
    %v945 = vunpack.c.l.b16 %v284
    %v946 = vunpack.c.h.b16 %v284
    %v947 = vunpack.c.l.b16 %v285
    %v948 = vunpack.c.h.b16 %v285
    %v949 = vunpack.c.l.b16 %v286
    %v950 = vunpack.c.h.b16 %v286
    %v951 = vunpack.c.l.b16 %v287
    %v952 = vunpack.c.h.b16 %v287
    %v953 = vunpack.c.l.b16 %v288
    %v954 = vunpack.c.h.b16 %v288
    %v955 = vunpack.c.l.b16 %v289
    %v956 = vunpack.c.h.b16 %v289
    %v957 = vunpack.c.l.b16 %v290
    %v958 = vunpack.c.h.b16 %v290
    %v959 = vunpack.c.l.b16 %v291
    %v960 = vunpack.c.h.b16 %v291
    %v961 = vunpack.c.l.b16 %v292
    %v962 = vunpack.c.h.b16 %v292
    %v963 = vunpack.c.l.b16 %v293
    %v964 = vunpack.c.h.b16 %v293
    %v965 = vunpack.c.l.b16 %v294
    %v966 = vunpack.c.h.b16 %v294
    %v967 = vunpack.c.l.b16 %v295
    %v968 = vunpack.c.h.b16 %v295
    %v969 = vunpack.c.l.b16 %v296
    %v970 = vunpack.c.h.b16 %v296
    %v971 = vunpack.c.l.b16 %v297
    %v972 = vunpack.c.h.b16 %v297
    %v973 = vunpack.c.l.b16 %v298
    %v974 = vunpack.c.h.b16 %v298
    %v975 = vunpack.c.l.b16 %v299
    %v976 = vunpack.c.h.b16 %v299
    %v977 = vunpack.c.l.b16 %v300
    %v978 = vunpack.c.h.b16 %v300
    %v979 = vunpack.c.l.b16 %v301
    %v980 = vunpack.c.h.b16 %v301
    %v981 = vunpack.c.l.b16 %v302
    %v982 = vunpack.c.h.b16 %v302
    %v983 = vunpack.c.l.b16 %v303
    %v984 = vunpack.c.h.b16 %v303
    %v985 = vunpack.c.l.b16 %v304
    %v986 = vunpack.c.h.b16 %v304
    %v987 = vunpack.c.l.b16 %v305
    %v988 = vunpack.c.h.b16 %v305
    %v989 = vunpack.c.l.b16 %v306
    %v990 = vunpack.c.h.b16 %v306
    %v991 = vunpack.c.l.b16 %v307
    %v992 = vunpack.c.h.b16 %v307
    %v993 = vunpack.c.l.b16 %v308
    %v994 = vunpack.c.h.b16 %v308
    %v995 = vunpack.c.l.b16 %v309
    %v996 = vunpack.c.h.b16 %v309
    %v997 = vunpack.c.l.b16 %v310
    %v998 = vunpack.c.h.b16 %v310
    %v999 = vunpack.c.l.b16 %v311
    %v1000 = vunpack.c.h.b16 %v311
    %v1001 = vunpack.c.l.b16 %v312
    %v1002 = vunpack.c.h.b16 %v312
    %v1003 = vunpack.c.l.b16 %v313
    %v1004 = vunpack.c.h.b16 %v313
    %v1005 = vunpack.c.l.b16 %v314
    %v1006 = vunpack.c.h.b16 %v314
    %v1007 = vunpack.c.l.b16 %v315
    %v1008 = vunpack.c.h.b16 %v315
    %v1009 = vunpack.c.l.b16 %v316
    %v1010 = vunpack.c.h.b16 %v316
    %v1011 = vunpack.c.l.b16 %v317
    %v1012 = vunpack.c.h.b16 %v317
    %v1013 = vunpack.c.l.b16 %v318
    %v1014 = vunpack.c.h.b16 %v318
    %v1015 = vunpack.c.l.b16 %v319
    %v1016 = vunpack.c.h.b16 %v319
    %v1017 = vunpack.c.l.b16 %v320
    %v1018 = vunpack.c.h.b16 %v320
    %v1019 = vunpack.c.l.b16 %v321
    %v1020 = vunpack.c.h.b16 %v321
    %v1021 = vunpack.c.l.b16 %v322
    %v1022 = vunpack.c.h.b16 %v322
    %v1023 = vunpack.c.l.b16 %v323
    %v1024 = vunpack.c.h.b16 %v323
    %v1025 = vunpack.c.l.b16 %v324
    %v1026 = vunpack.c.h.b16 %v324
    %v1027 = vunpack.c.l.b16 %v325
    %v1028 = vunpack.c.h.b16 %v325
    %v1029 = vunpack.c.l.b16 %v326
    %v1030 = vunpack.c.h.b16 %v326
    %v1031 = vunpack.c.l.b16 %v327
    %v1032 = vunpack.c.h.b16 %v327
    %v1033 = vunpack.c.l.b16 %v328
    %v1034 = vunpack.c.h.b16 %v328
    %v1035 = vunpack.c.l.b16 %v329
    %v1036 = vunpack.c.h.b16 %v329
    %v1037 = vunpack.c.l.b16 %v330
    %v1038 = vunpack.c.h.b16 %v330
    %v1039 = vunpack.c.l.b16 %v331
    %v1040 = vunpack.c.h.b16 %v331
    %v1041 = vunpack.c.l.b16 %v332
    %v1042 = vunpack.c.h.b16 %v332
    %v1043 = vunpack.c.l.b16 %v333
    %v1044 = vunpack.c.h.b16 %v333
    %v1045 = vunpack.c.l.b16 %v334
    %v1046 = vunpack.c.h.b16 %v334
    %v1047 = vunpack.c.l.b16 %v335
    %v1048 = vunpack.c.h.b16 %v335
    %v1049 = vunpack.c.l.b16 %v336
    %v1050 = vunpack.c.h.b16 %v336
    %v1051 = vunpack.c.l.b16 %v337
    %v1052 = vunpack.c.h.b16 %v337
    %v1053 = vunpack.c.l.b16 %v338
    %v1054 = vunpack.c.h.b16 %v338
    %v1055 = vunpack.c.l.b16 %v339
    %v1056 = vunpack.c.h.b16 %v339
    %v1057 = vunpack.c.l.b16 %v340
    %v1058 = vunpack.c.h.b16 %v340
    %v1059 = vunpack.c.l.b16 %v341
    %v1060 = vunpack.c.h.b16 %v341
    %v1061 = vunpack.c.l.b16 %v342
    %v1062 = vunpack.c.h.b16 %v342
    %v1063 = vunpack.c.l.b16 %v343
    %v1064 = vunpack.c.h.b16 %v343
    %v1065 = vunpack.c.l.b16 %v344
    %v1066 = vunpack.c.h.b16 %v344
    %v1067 = vunpack.c.l.b16 %v345
    %v1068 = vunpack.c.h.b16 %v345
    %v1069 = vunpack.c.l.b16 %v346
    %v1070 = vunpack.c.h.b16 %v346
    %v1071 = vunpack.c.l.b16 %v347
    %v1072 = vunpack.c.h.b16 %v347
    %v1073 = vunpack.c.l.b16 %v348
    %v1074 = vunpack.c.h.b16 %v348
    %v1075 = vunpack.c.l.b16 %v349
    %v1076 = vunpack.c.h.b16 %v349
    %v1077 = vunpack.c.l.b16 %v350
    %v1078 = vunpack.c.h.b16 %v350
    %v1079 = vunpack.c.l.b16 %v351
    %v1080 = vunpack.c.h.b16 %v351
    %v1081 = vunpack.c.l.b16 %v352
    %v1082 = vunpack.c.h.b16 %v352
    %v1083 = vunpack.c.l.b16 %v353
    %v1084 = vunpack.c.h.b16 %v353
    %v1085 = vunpack.c.l.b16 %v354
    %v1086 = vunpack.c.h.b16 %v354
    %v1087 = vunpack.c.l.b16 %v355
    %v1088 = vunpack.c.h.b16 %v355
    %v1089 = vunpack.c.l.b16 %v356
    %v1090 = vunpack.c.h.b16 %v356
    %v1091 = vunpack.c.l.b16 %v357
    %v1092 = vunpack.c.h.b16 %v357
    %v1093 = vunpack.c.l.b16 %v358
    %v1094 = vunpack.c.h.b16 %v358
    %v1095 = vunpack.c.l.b16 %v359
    %v1096 = vunpack.c.h.b16 %v359
    %v1097 = vunpack.c.l.b16 %v360
    %v1098 = vunpack.c.h.b16 %v360
    %v1099 = vunpack.c.l.b16 %v361
    %v1100 = vunpack.c.h.b16 %v361
    %v1101 = vunpack.c.l.b16 %v362
    %v1102 = vunpack.c.h.b16 %v362
    %v1103 = vunpack.c.l.b16 %v363
    %v1104 = vunpack.c.h.b16 %v363
    %v1105 = vunpack.c.l.b16 %v364
    %v1106 = vunpack.c.h.b16 %v364
    %v1107 = vunpack.c.l.b16 %v365
    %v1108 = vunpack.c.h.b16 %v365
    %v1109 = vunpack.c.l.b16 %v366
    %v1110 = vunpack.c.h.b16 %v366
    %v1111 = vunpack.c.l.b16 %v367
    %v1112 = vunpack.c.h.b16 %v367
    %v1113 = vunpack.c.l.b16 %v368
    %v1114 = vunpack.c.h.b16 %v368
    %v1115 = vunpack.c.l.b16 %v369
    %v1116 = vunpack.c.h.b16 %v369
    %v1117 = vunpack.c.l.b16 %v370
    %v1118 = vunpack.c.h.b16 %v370
    %v1119 = vunpack.c.l.b16 %v371
    %v1120 = vunpack.c.h.b16 %v371
    %v1121 = vunpack.c.l.b16 %v372
    %v1122 = vunpack.c.h.b16 %v372
    %v1123 = vunpack.c.l.b16 %v373
    %v1124 = vunpack.c.h.b16 %v373
    %v1125 = vunpack.c.l.b16 %v374
    %v1126 = vunpack.c.h.b16 %v374
    %v1127 = vunpack.c.l.b16 %v375
    %v1128 = vunpack.c.h.b16 %v375
    %v1129 = vunpack.c.l.b16 %v376
    %v1130 = vunpack.c.h.b16 %v376
    %v1131 = vunpack.c.l.b16 %v377
    %v1132 = vunpack.c.h.b16 %v377
    %v1133 = vunpack.c.l.b16 %v378
    %v1134 = vunpack.c.h.b16 %v378
    %v1135 = vunpack.c.l.b16 %v379
    %v1136 = vunpack.c.h.b16 %v379
    %v1137 = vunpack.c.l.b16 %v380
    %v1138 = vunpack.c.h.b16 %v380
    %v1139 = vunpack.c.l.b16 %v381
    %v1140 = vunpack.c.h.b16 %v381
    %v1141 = vunpack.c.l.b16 %v382
    %v1142 = vunpack.c.h.b16 %v382
    %v1143 = vunpack.c.l.b16 %v383
    %v1144 = vunpack.c.h.b16 %v383
    %v1145 = vunpack.c.l.b16 %v384
    %v1146 = vunpack.c.h.b16 %v384
    %v1147 = vunpack.c.l.b16 %v385
    %v1148 = vunpack.c.h.b16 %v385
    %v1149 = vunpack.c.l.b16 %v386
    %v1150 = vunpack.c.h.b16 %v386
    %v1151 = vunpack.c.l.b16 %v387
    %v1152 = vunpack.c.h.b16 %v387
    %v1153 = vunpack.c.l.b16 %v388
    %v1154 = vunpack.c.h.b16 %v388
    %v1155 = vunpack.c.l.b16 %v389
    %v1156 = vunpack.c.h.b16 %v389
    %v1157 = vunpack.c.l.b16 %v390
    %v1158 = vunpack.c.h.b16 %v390
    %v1159 = vunpack.c.l.b16 %v391
    %v1160 = vunpack.c.h.b16 %v391
    %v1161 = vunpack.c.l.b16 %v392
    %v1162 = vunpack.c.h.b16 %v392
    %v1163 = vunpack.c.l.b16 %v393
    %v1164 = vunpack.c.h.b16 %v393
    %v1165 = vunpack.c.l.b16 %v394
    %v1166 = vunpack.c.h.b16 %v394
    %v1167 = vpack.c.b16 %v671, %v667
    %v1168 = vpack.c.b16 %v672, %v668
    %v1169 = vpack.c.b16 %v673, %v669
    %v1170 = vpack.c.b16 %v674, %v670
    %v1171 = vpack.c.b16 %v679, %v675
    %v1172 = vpack.c.b16 %v680, %v676
    %v1173 = vpack.c.b16 %v681, %v677
    %v1174 = vpack.c.b16 %v682, %v678
    %v1175 = vpack.c.b16 %v687, %v683
    %v1176 = vpack.c.b16 %v688, %v684
    %v1177 = vpack.c.b16 %v689, %v685
    %v1178 = vpack.c.b16 %v690, %v686
    %v1179 = vpack.c.b16 %v695, %v691
    %v1180 = vpack.c.b16 %v696, %v692
    %v1181 = vpack.c.b16 %v697, %v693
    %v1182 = vpack.c.b16 %v698, %v694
    %v1183 = vpack.c.b16 %v703, %v699
    %v1184 = vpack.c.b16 %v704, %v700
    %v1185 = vpack.c.b16 %v705, %v701
    %v1186 = vpack.c.b16 %v706, %v702
    %v1187 = vpack.c.b16 %v711, %v707
    %v1188 = vpack.c.b16 %v712, %v708
    %v1189 = vpack.c.b16 %v713, %v709
    %v1190 = vpack.c.b16 %v714, %v710
    %v1191 = vpack.c.b16 %v719, %v715
    %v1192 = vpack.c.b16 %v720, %v716
    %v1193 = vpack.c.b16 %v721, %v717
    %v1194 = vpack.c.b16 %v722, %v718
    %v1195 = vpack.c.b16 %v727, %v723
    %v1196 = vpack.c.b16 %v728, %v724
    %v1197 = vpack.c.b16 %v729, %v725
    %v1198 = vpack.c.b16 %v730, %v726
    %v1199 = vpack.c.b16 %v735, %v731
    %v1200 = vpack.c.b16 %v736, %v732
    %v1201 = vpack.c.b16 %v737, %v733
    %v1202 = vpack.c.b16 %v738, %v734
    %v1203 = vpack.c.b16 %v743, %v739
    %v1204 = vpack.c.b16 %v744, %v740
    %v1205 = vpack.c.b16 %v745, %v741
    %v1206 = vpack.c.b16 %v746, %v742
    %v1207 = vpack.c.b16 %v751, %v747
    %v1208 = vpack.c.b16 %v752, %v748
    %v1209 = vpack.c.b16 %v753, %v749
    %v1210 = vpack.c.b16 %v754, %v750
    %v1211 = vpack.c.b16 %v759, %v755
    %v1212 = vpack.c.b16 %v760, %v756
    %v1213 = vpack.c.b16 %v761, %v757
    %v1214 = vpack.c.b16 %v762, %v758
    %v1215 = vpack.c.b16 %v767, %v763
    %v1216 = vpack.c.b16 %v768, %v764
    %v1217 = vpack.c.b16 %v769, %v765
    %v1218 = vpack.c.b16 %v770, %v766
    %v1219 = vpack.c.b16 %v775, %v771
    %v1220 = vpack.c.b16 %v776, %v772
    %v1221 = vpack.c.b16 %v777, %v773
    %v1222 = vpack.c.b16 %v778, %v774
    %v1223 = vpack.c.b16 %v783, %v779
    %v1224 = vpack.c.b16 %v784, %v780
    %v1225 = vpack.c.b16 %v785, %v781
    %v1226 = vpack.c.b16 %v786, %v782
    %v1227 = vpack.c.b16 %v791, %v787
    %v1228 = vpack.c.b16 %v792, %v788
    %v1229 = vpack.c.b16 %v793, %v789
    %v1230 = vpack.c.b16 %v794, %v790
    %v1231 = vpack.c.b16 %v799, %v795
    %v1232 = vpack.c.b16 %v800, %v796
    %v1233 = vpack.c.b16 %v801, %v797
    %v1234 = vpack.c.b16 %v802, %v798
    %v1235 = vpack.c.b16 %v807, %v803
    %v1236 = vpack.c.b16 %v808, %v804
    %v1237 = vpack.c.b16 %v809, %v805
    %v1238 = vpack.c.b16 %v810, %v806
    %v1239 = vpack.c.b16 %v815, %v811
    %v1240 = vpack.c.b16 %v816, %v812
    %v1241 = vpack.c.b16 %v817, %v813
    %v1242 = vpack.c.b16 %v818, %v814
    %v1243 = vpack.c.b16 %v823, %v819
    %v1244 = vpack.c.b16 %v824, %v820
    %v1245 = vpack.c.b16 %v825, %v821
    %v1246 = vpack.c.b16 %v826, %v822
    %v1247 = vpack.c.b16 %v831, %v827
    %v1248 = vpack.c.b16 %v832, %v828
    %v1249 = vpack.c.b16 %v833, %v829
    %v1250 = vpack.c.b16 %v834, %v830
    %v1251 = vpack.c.b16 %v839, %v835
    %v1252 = vpack.c.b16 %v840, %v836
    %v1253 = vpack.c.b16 %v841, %v837
    %v1254 = vpack.c.b16 %v842, %v838
    %v1255 = vpack.c.b16 %v847, %v843
    %v1256 = vpack.c.b16 %v848, %v844
    %v1257 = vpack.c.b16 %v849, %v845
    %v1258 = vpack.c.b16 %v850, %v846
    %v1259 = vpack.c.b16 %v855, %v851
    %v1260 = vpack.c.b16 %v856, %v852
    %v1261 = vpack.c.b16 %v857, %v853
    %v1262 = vpack.c.b16 %v858, %v854
    %v1263 = vpack.c.b16 %v863, %v859
    %v1264 = vpack.c.b16 %v864, %v860
    %v1265 = vpack.c.b16 %v865, %v861
    %v1266 = vpack.c.b16 %v866, %v862
    %v1267 = vpack.c.b16 %v871, %v867
    %v1268 = vpack.c.b16 %v872, %v868
    %v1269 = vpack.c.b16 %v873, %v869
    %v1270 = vpack.c.b16 %v874, %v870
    %v1271 = vpack.c.b16 %v879, %v875
    %v1272 = vpack.c.b16 %v880, %v876
    %v1273 = vpack.c.b16 %v881, %v877
    %v1274 = vpack.c.b16 %v882, %v878
    %v1275 = vpack.c.b16 %v887, %v883
    %v1276 = vpack.c.b16 %v888, %v884
    %v1277 = vpack.c.b16 %v889, %v885
    %v1278 = vpack.c.b16 %v890, %v886
    %v1279 = vpack.c.b16 %v895, %v891
    %v1280 = vpack.c.b16 %v896, %v892
    %v1281 = vpack.c.b16 %v897, %v893
    %v1282 = vpack.c.b16 %v898, %v894
    %v1283 = vpack.c.b16 %v903, %v899
    %v1284 = vpack.c.b16 %v904, %v900
    %v1285 = vpack.c.b16 %v905, %v901
    %v1286 = vpack.c.b16 %v906, %v902
    %v1287 = vpack.c.b16 %v911, %v907
    %v1288 = vpack.c.b16 %v912, %v908
    %v1289 = vpack.c.b16 %v913, %v909
    %v1290 = vpack.c.b16 %v914, %v910
    %v1291 = vpack.c.b16 %v919, %v915
    %v1292 = vpack.c.b16 %v920, %v916
    %v1293 = vpack.c.b16 %v921, %v917
    %v1294 = vpack.c.b16 %v922, %v918
    %v1295 = vpack.c.b16 %v927, %v923
    %v1296 = vpack.c.b16 %v928, %v924
    %v1297 = vpack.c.b16 %v929, %v925
    %v1298 = vpack.c.b16 %v930, %v926
    %v1299 = vpack.c.b16 %v935, %v931
    %v1300 = vpack.c.b16 %v936, %v932
    %v1301 = vpack.c.b16 %v937, %v933
    %v1302 = vpack.c.b16 %v938, %v934
    %v1303 = vpack.c.b16 %v943, %v939
    %v1304 = vpack.c.b16 %v944, %v940
    %v1305 = vpack.c.b16 %v945, %v941
    %v1306 = vpack.c.b16 %v946, %v942
    %v1307 = vpack.c.b16 %v951, %v947
    %v1308 = vpack.c.b16 %v952, %v948
    %v1309 = vpack.c.b16 %v953, %v949
    %v1310 = vpack.c.b16 %v954, %v950
    %v1311 = vpack.c.b16 %v959, %v955
    %v1312 = vpack.c.b16 %v960, %v956
    %v1313 = vpack.c.b16 %v961, %v957
    %v1314 = vpack.c.b16 %v962, %v958
    %v1315 = vpack.c.b16 %v967, %v963
    %v1316 = vpack.c.b16 %v968, %v964
    %v1317 = vpack.c.b16 %v969, %v965
    %v1318 = vpack.c.b16 %v970, %v966
    %v1319 = vpack.c.b16 %v975, %v971
    %v1320 = vpack.c.b16 %v976, %v972
    %v1321 = vpack.c.b16 %v977, %v973
    %v1322 = vpack.c.b16 %v978, %v974
    %v1323 = vpack.c.b16 %v983, %v979
    %v1324 = vpack.c.b16 %v984, %v980
    %v1325 = vpack.c.b16 %v985, %v981
    %v1326 = vpack.c.b16 %v986, %v982
    %v1327 = vpack.c.b16 %v991, %v987
    %v1328 = vpack.c.b16 %v992, %v988
    %v1329 = vpack.c.b16 %v993, %v989
    %v1330 = vpack.c.b16 %v994, %v990
    %v1331 = vpack.c.b16 %v999, %v995
    %v1332 = vpack.c.b16 %v1000, %v996
    %v1333 = vpack.c.b16 %v1001, %v997
    %v1334 = vpack.c.b16 %v1002, %v998
    %v1335 = vpack.c.b16 %v1007, %v1003
    %v1336 = vpack.c.b16 %v1008, %v1004
    %v1337 = vpack.c.b16 %v1009, %v1005
    %v1338 = vpack.c.b16 %v1010, %v1006
    %v1339 = vpack.c.b16 %v1015, %v1011
    %v1340 = vpack.c.b16 %v1016, %v1012
    %v1341 = vpack.c.b16 %v1017, %v1013
    %v1342 = vpack.c.b16 %v1018, %v1014
    %v1343 = vpack.c.b16 %v1023, %v1019
    %v1344 = vpack.c.b16 %v1024, %v1020
    %v1345 = vpack.c.b16 %v1025, %v1021
    %v1346 = vpack.c.b16 %v1026, %v1022
    %v1347 = vpack.c.b16 %v1031, %v1027
    %v1348 = vpack.c.b16 %v1032, %v1028
    %v1349 = vpack.c.b16 %v1033, %v1029
    %v1350 = vpack.c.b16 %v1034, %v1030
    %v1351 = vpack.c.b16 %v1039, %v1035
    %v1352 = vpack.c.b16 %v1040, %v1036
    %v1353 = vpack.c.b16 %v1041, %v1037
    %v1354 = vpack.c.b16 %v1042, %v1038
    %v1355 = vpack.c.b16 %v1047, %v1043
    %v1356 = vpack.c.b16 %v1048, %v1044
    %v1357 = vpack.c.b16 %v1049, %v1045
    %v1358 = vpack.c.b16 %v1050, %v1046
    %v1359 = vpack.c.b16 %v1055, %v1051
    %v1360 = vpack.c.b16 %v1056, %v1052
    %v1361 = vpack.c.b16 %v1057, %v1053
    %v1362 = vpack.c.b16 %v1058, %v1054
    %v1363 = vpack.c.b16 %v1063, %v1059
    %v1364 = vpack.c.b16 %v1064, %v1060
    %v1365 = vpack.c.b16 %v1065, %v1061
    %v1366 = vpack.c.b16 %v1066, %v1062
    %v1367 = vpack.c.b16 %v1071, %v1067
    %v1368 = vpack.c.b16 %v1072, %v1068
    %v1369 = vpack.c.b16 %v1073, %v1069
    %v1370 = vpack.c.b16 %v1074, %v1070
    %v1371 = vpack.c.b16 %v1079, %v1075
    %v1372 = vpack.c.b16 %v1080, %v1076
    %v1373 = vpack.c.b16 %v1081, %v1077
    %v1374 = vpack.c.b16 %v1082, %v1078
    %v1375 = vpack.c.b16 %v1087, %v1083
    %v1376 = vpack.c.b16 %v1088, %v1084
    %v1377 = vpack.c.b16 %v1089, %v1085
    %v1378 = vpack.c.b16 %v1090, %v1086
    %v1379 = vpack.c.b16 %v1095, %v1091
    %v1380 = vpack.c.b16 %v1096, %v1092
    %v1381 = vpack.c.b16 %v1097, %v1093
    %v1382 = vpack.c.b16 %v1098, %v1094
    %v1383 = vpack.c.b16 %v1103, %v1099
    %v1384 = vpack.c.b16 %v1104, %v1100
    %v1385 = vpack.c.b16 %v1105, %v1101
    %v1386 = vpack.c.b16 %v1106, %v1102
    %v1387 = vpack.c.b16 %v1111, %v1107
    %v1388 = vpack.c.b16 %v1112, %v1108
    %v1389 = vpack.c.b16 %v1113, %v1109
    %v1390 = vpack.c.b16 %v1114, %v1110
    %v1391 = vpack.c.b16 %v1119, %v1115
    %v1392 = vpack.c.b16 %v1120, %v1116
    %v1393 = vpack.c.b16 %v1121, %v1117
    %v1394 = vpack.c.b16 %v1122, %v1118
    %v1395 = vpack.c.b16 %v1127, %v1123
    %v1396 = vpack.c.b16 %v1128, %v1124
    %v1397 = vpack.c.b16 %v1129, %v1125
    %v1398 = vpack.c.b16 %v1130, %v1126
    %v1399 = vpack.c.b16 %v1135, %v1131
    %v1400 = vpack.c.b16 %v1136, %v1132
    %v1401 = vpack.c.b16 %v1137, %v1133
    %v1402 = vpack.c.b16 %v1138, %v1134
    %v1403 = vpack.c.b16 %v1143, %v1139
    %v1404 = vpack.c.b16 %v1144, %v1140
    %v1405 = vpack.c.b16 %v1145, %v1141
    %v1406 = vpack.c.b16 %v1146, %v1142
    %v1407 = vpack.c.b16 %v1151, %v1147
    %v1408 = vpack.c.b16 %v1152, %v1148
    %v1409 = vpack.c.b16 %v1153, %v1149
    %v1410 = vpack.c.b16 %v1154, %v1150
    %v1411 = vpack.c.b16 %v1159, %v1155
    %v1412 = vpack.c.b16 %v1160, %v1156
    %v1413 = vpack.c.b16 %v1161, %v1157
    %v1414 = vpack.c.b16 %v1162, %v1158
    %v1415 = vpack.c.b16 %v1163, %v1163
    %v1416 = vpack.c.b16 %v1164, %v1164
    %v1417 = vpack.c.b16 %v1165, %v1165
    %v1418 = vpack.c.b16 %v1166, %v1166
    %vm1667 = vcmask 850944
    %v1669 = vsel %vm1667, %v144, 0
    %vm1671 = vcmask 1043456
    %v1673 = vsel %vm1671, %v1415, 0
    %v1676 = vsel %vm1671, %v1416, 0
    %v1679 = vsel %vm1671, %v1417, 0
    %v1682 = vsel %vm1671, %v1418, 0
    %1684 = vmatprep.subr.bf16.mxu0 %v1196
    %1685 = vmatpush1.bf16.msra.mxu0 %v1195
    %1686 = vmatprep.subr.bf16.mxu0 %v1192
    %1687 = vmatpush1.bf16.msra.mxu0 %v1191
    %1688 = vmatprep.subr.bf16.mxu0 %v1188
    %1689 = vmatpush1.bf16.msra.mxu0 %v1187
    %1690 = vmatprep.subr.bf16.mxu0 %v1184
    %1691 = vmatpush1.bf16.msra.mxu0 %v1183
    %1692 = vmatprep.subr.bf16.mxu0 %v1180
    %1693 = vmatpush1.bf16.msra.mxu0 %v1179
    %1694 = vmatprep.subr.bf16.mxu0 %v1176
    %1695 = vmatpush1.bf16.msra.mxu0 %v1175
    %1696 = vmatprep.subr.bf16.mxu0 %v1172
    %1697 = vmatpush1.bf16.msra.mxu0 %v1171
    %1698 = vmatprep.subr.bf16.mxu0 %v1168
    %1699 = vmatpush1.bf16.msra.mxu0 %v1167
    %1700 = vmatprep.subr.bf16.mxu0 %v1228
    %1701 = vmatpush2.bf16.msra.mxu0 %v1227
    %1702 = vmatprep.subr.bf16.mxu0 %v1224
    %1703 = vmatpush2.bf16.msra.mxu0 %v1223
    %1704 = vmatprep.subr.bf16.mxu0 %v1220
    %1705 = vmatpush2.bf16.msra.mxu0 %v1219
    %1706 = vmatprep.subr.bf16.mxu0 %v1216
    %1707 = vmatpush2.bf16.msra.mxu0 %v1215
    %1708 = vmatprep.subr.bf16.mxu0 %v1212
    %1709 = vmatpush2.bf16.msra.mxu0 %v1211
    %1710 = vmatprep.subr.bf16.mxu0 %v1208
    %1711 = vmatpush2.bf16.msra.mxu0 %v1207
    %1712 = vmatprep.subr.bf16.mxu0 %v1204
    %1713 = vmatpush2.bf16.msra.mxu0 %v1203
    %1714 = vmatprep.subr.bf16.mxu0 %v1200
    %1715 = vmatpush2.bf16.msra.mxu0 %v1199
    %1716 = vmatprep.mubr.bf16.mxu0 %v138
    %1717 = vmatmul.mubr.bf16.gmra.mxu0 %v137
    %v1718 = vpop.f32.mrf.mxu0
    %v1719 = vadd.f32 %v400, %v1718
    %v1720 = vpop.f32.mrf.mxu0
    %v1721 = vadd.f32 %v404, %v1720
    %v1722 = vpop.f32.mrf.mxu0
    %v1723 = vpop.f32.mrf.mxu0
    %1724 = vdwg.mxu0
    %1725 = vmatprep.subr.bf16.mxu0 %v1260
    %1726 = vmatpush1.bf16.msra.mxu0 %v1259
    %1727 = vmatprep.subr.bf16.mxu0 %v1256
    %1728 = vmatpush1.bf16.msra.mxu0 %v1255
    %1729 = vmatprep.subr.bf16.mxu0 %v1252
    %1730 = vmatpush1.bf16.msra.mxu0 %v1251
    %1731 = vmatprep.subr.bf16.mxu0 %v1248
    %1732 = vmatpush1.bf16.msra.mxu0 %v1247
    %1733 = vmatprep.subr.bf16.mxu0 %v1244
    %1734 = vmatpush1.bf16.msra.mxu0 %v1243
    %1735 = vmatprep.subr.bf16.mxu0 %v1240
    %1736 = vmatpush1.bf16.msra.mxu0 %v1239
    %1737 = vmatprep.subr.bf16.mxu0 %v1236
    %1738 = vmatpush1.bf16.msra.mxu0 %v1235
    %1739 = vmatprep.subr.bf16.mxu0 %v1232
    %1740 = vmatpush1.bf16.msra.mxu0 %v1231
    %1741 = vmatprep.subr.bf16.mxu0 %v1292
    %1742 = vmatpush2.bf16.msra.mxu0 %v1291
    %1743 = vmatprep.subr.bf16.mxu0 %v1288
    %1744 = vmatpush2.bf16.msra.mxu0 %v1287
    %1745 = vmatprep.subr.bf16.mxu0 %v1284
    %1746 = vmatpush2.bf16.msra.mxu0 %v1283
    %1747 = vmatprep.subr.bf16.mxu0 %v1280
    %1748 = vmatpush2.bf16.msra.mxu0 %v1279
    %1749 = vmatprep.subr.bf16.mxu0 %v1276
    %1750 = vmatpush2.bf16.msra.mxu0 %v1275
    %1751 = vmatprep.subr.bf16.mxu0 %v1272
    %1752 = vmatpush2.bf16.msra.mxu0 %v1271
    %1753 = vmatprep.subr.bf16.mxu0 %v1268
    %1754 = vmatpush2.bf16.msra.mxu0 %v1267
    %1755 = vmatprep.subr.bf16.mxu0 %v1264
    %1756 = vmatpush2.bf16.msra.mxu0 %v1263
    %1757 = vmatprep.mubr.bf16.mxu0 %v140
    %1758 = vmatmul.mubr.bf16.gmra.mxu0 %v139
    %v1759 = vpop.f32.mrf.mxu0
    %v1760 = vadd.f32 %v1719, %v1759
    %v1761 = vpop.f32.mrf.mxu0
    %v1762 = vadd.f32 %v1721, %v1761
    %v1763 = vpop.f32.mrf.mxu0
    %v1764 = vpop.f32.mrf.mxu0
    %1765 = vdwg.mxu0
    %1766 = vmatprep.subr.bf16.mxu0 %v1324
    %1767 = vmatpush1.bf16.msra.mxu0 %v1323
    %1768 = vmatprep.subr.bf16.mxu0 %v1320
    %1769 = vmatpush1.bf16.msra.mxu0 %v1319
    %1770 = vmatprep.subr.bf16.mxu0 %v1316
    %1771 = vmatpush1.bf16.msra.mxu0 %v1315
    %1772 = vmatprep.subr.bf16.mxu0 %v1312
    %1773 = vmatpush1.bf16.msra.mxu0 %v1311
    %1774 = vmatprep.subr.bf16.mxu0 %v1308
    %1775 = vmatpush1.bf16.msra.mxu0 %v1307
    %1776 = vmatprep.subr.bf16.mxu0 %v1304
    %1777 = vmatpush1.bf16.msra.mxu0 %v1303
    %1778 = vmatprep.subr.bf16.mxu0 %v1300
    %1779 = vmatpush1.bf16.msra.mxu0 %v1299
    %1780 = vmatprep.subr.bf16.mxu0 %v1296
    %1781 = vmatpush1.bf16.msra.mxu0 %v1295
    %1782 = vmatprep.subr.bf16.mxu0 %v1356
    %1783 = vmatpush2.bf16.msra.mxu0 %v1355
    %1784 = vmatprep.subr.bf16.mxu0 %v1352
    %1785 = vmatpush2.bf16.msra.mxu0 %v1351
    %1786 = vmatprep.subr.bf16.mxu0 %v1348
    %1787 = vmatpush2.bf16.msra.mxu0 %v1347
    %1788 = vmatprep.subr.bf16.mxu0 %v1344
    %1789 = vmatpush2.bf16.msra.mxu0 %v1343
    %1790 = vmatprep.subr.bf16.mxu0 %v1340
    %1791 = vmatpush2.bf16.msra.mxu0 %v1339
    %1792 = vmatprep.subr.bf16.mxu0 %v1336
    %1793 = vmatpush2.bf16.msra.mxu0 %v1335
    %1794 = vmatprep.subr.bf16.mxu0 %v1332
    %1795 = vmatpush2.bf16.msra.mxu0 %v1331
    %1796 = vmatprep.subr.bf16.mxu0 %v1328
    %1797 = vmatpush2.bf16.msra.mxu0 %v1327
    %1798 = vmatprep.mubr.bf16.mxu0 %v142
    %1799 = vmatmul.mubr.bf16.gmra.mxu0 %v141
    %v1800 = vpop.f32.mrf.mxu0
    %v1801 = vadd.f32 %v1760, %v1800
    %v1802 = vpop.f32.mrf.mxu0
    %v1803 = vadd.f32 %v1762, %v1802
    %v1804 = vpop.f32.mrf.mxu0
    %v1805 = vpop.f32.mrf.mxu0
    %1806 = vdwg.mxu0
    %1807 = vmatprep.subr.bf16.mxu0 %v1388
    %1808 = vmatpush1.bf16.msra.mxu0 %v1387
    %1809 = vmatprep.subr.bf16.mxu0 %v1384
    %1810 = vmatpush1.bf16.msra.mxu0 %v1383
    %1811 = vmatprep.subr.bf16.mxu0 %v1380
    %1812 = vmatpush1.bf16.msra.mxu0 %v1379
    %1813 = vmatprep.subr.bf16.mxu0 %v1376
    %1814 = vmatpush1.bf16.msra.mxu0 %v1375
    %1815 = vmatprep.subr.bf16.mxu0 %v1372
    %1816 = vmatpush1.bf16.msra.mxu0 %v1371
    %1817 = vmatprep.subr.bf16.mxu0 %v1368
    %1818 = vmatpush1.bf16.msra.mxu0 %v1367
    %1819 = vmatprep.subr.bf16.mxu0 %v1364
    %1820 = vmatpush1.bf16.msra.mxu0 %v1363
    %1821 = vmatprep.subr.bf16.mxu0 %v1360
    %1822 = vmatpush1.bf16.msra.mxu0 %v1359
    %1823 = vmatprep.subr.bf16.mxu0 0
    %1824 = vmatpush2.bf16.msra.mxu0 0
    %1825 = vmatprep.subr.bf16.mxu0 %v1676
    %1826 = vmatpush2.bf16.msra.mxu0 %v1673
    %1827 = vmatprep.subr.bf16.mxu0 %v1412
    %1828 = vmatpush2.bf16.msra.mxu0 %v1411
    %1829 = vmatprep.subr.bf16.mxu0 %v1408
    %1830 = vmatpush2.bf16.msra.mxu0 %v1407
    %1831 = vmatprep.subr.bf16.mxu0 %v1404
    %1832 = vmatpush2.bf16.msra.mxu0 %v1403
    %1833 = vmatprep.subr.bf16.mxu0 %v1400
    %1834 = vmatpush2.bf16.msra.mxu0 %v1399
    %1835 = vmatprep.subr.bf16.mxu0 %v1396
    %1836 = vmatpush2.bf16.msra.mxu0 %v1395
    %1837 = vmatprep.subr.bf16.mxu0 %v1392
    %1838 = vmatpush2.bf16.msra.mxu0 %v1391
    %1839 = vmatprep.mubr.bf16.mxu0 %v1669
    %1840 = vmatmul.mubr.bf16.gmra.mxu0 %v143
    %v1841 = vpop.f32.mrf.mxu0
    %v1842 = vadd.f32 %v1801, %v1841
    %v1843 = vpop.f32.mrf.mxu0
    %v1844 = vadd.f32 %v1803, %v1843
    %v1845 = vpop.f32.mrf.mxu0
    %v1846 = vpop.f32.mrf.mxu0
    %1847 = vdwg.mxu0
    %1848 = vmatprep.subr.bf16.mxu0 %v1198
    %1849 = vmatpush1.bf16.msra.mxu0 %v1197
    %1850 = vmatprep.subr.bf16.mxu0 %v1194
    %1851 = vmatpush1.bf16.msra.mxu0 %v1193
    %1852 = vmatprep.subr.bf16.mxu0 %v1190
    %1853 = vmatpush1.bf16.msra.mxu0 %v1189
    %1854 = vmatprep.subr.bf16.mxu0 %v1186
    %1855 = vmatpush1.bf16.msra.mxu0 %v1185
    %1856 = vmatprep.subr.bf16.mxu0 %v1182
    %1857 = vmatpush1.bf16.msra.mxu0 %v1181
    %1858 = vmatprep.subr.bf16.mxu0 %v1178
    %1859 = vmatpush1.bf16.msra.mxu0 %v1177
    %1860 = vmatprep.subr.bf16.mxu0 %v1174
    %1861 = vmatpush1.bf16.msra.mxu0 %v1173
    %1862 = vmatprep.subr.bf16.mxu0 %v1170
    %1863 = vmatpush1.bf16.msra.mxu0 %v1169
    %1864 = vmatprep.subr.bf16.mxu0 %v1230
    %1865 = vmatpush2.bf16.msra.mxu0 %v1229
    %1866 = vmatprep.subr.bf16.mxu0 %v1226
    %1867 = vmatpush2.bf16.msra.mxu0 %v1225
    %1868 = vmatprep.subr.bf16.mxu0 %v1222
    %1869 = vmatpush2.bf16.msra.mxu0 %v1221
    %1870 = vmatprep.subr.bf16.mxu0 %v1218
    %1871 = vmatpush2.bf16.msra.mxu0 %v1217
    %1872 = vmatprep.subr.bf16.mxu0 %v1214
    %1873 = vmatpush2.bf16.msra.mxu0 %v1213
    %1874 = vmatprep.subr.bf16.mxu0 %v1210
    %1875 = vmatpush2.bf16.msra.mxu0 %v1209
    %1876 = vmatprep.subr.bf16.mxu0 %v1206
    %1877 = vmatpush2.bf16.msra.mxu0 %v1205
    %1878 = vmatprep.subr.bf16.mxu0 %v1202
    %1879 = vmatpush2.bf16.msra.mxu0 %v1201
    %1880 = vmatprep.mubr.bf16.mxu0 %v138
    %1881 = vmatmul.mubr.bf16.gmra.mxu0 %v137
    %v1882 = vpop.f32.mrf.mxu0
    %v1883 = vadd.f32 %v408, %v1882
    %v1884 = vpop.f32.mrf.mxu0
    %v1885 = vadd.f32 %v412, %v1884
    %v1886 = vpop.f32.mrf.mxu0
    %v1887 = vpop.f32.mrf.mxu0
    %1888 = vdwg.mxu0
    %1889 = vmatprep.subr.bf16.mxu0 %v1262
    %1890 = vmatpush1.bf16.msra.mxu0 %v1261
    %1891 = vmatprep.subr.bf16.mxu0 %v1258
    %1892 = vmatpush1.bf16.msra.mxu0 %v1257
    %1893 = vmatprep.subr.bf16.mxu0 %v1254
    %1894 = vmatpush1.bf16.msra.mxu0 %v1253
    %1895 = vmatprep.subr.bf16.mxu0 %v1250
    %1896 = vmatpush1.bf16.msra.mxu0 %v1249
    %1897 = vmatprep.subr.bf16.mxu0 %v1246
    %1898 = vmatpush1.bf16.msra.mxu0 %v1245
    %1899 = vmatprep.subr.bf16.mxu0 %v1242
    %1900 = vmatpush1.bf16.msra.mxu0 %v1241
    %1901 = vmatprep.subr.bf16.mxu0 %v1238
    %1902 = vmatpush1.bf16.msra.mxu0 %v1237
    %1903 = vmatprep.subr.bf16.mxu0 %v1234
    %1904 = vmatpush1.bf16.msra.mxu0 %v1233
    %1905 = vmatprep.subr.bf16.mxu0 %v1294
    %1906 = vmatpush2.bf16.msra.mxu0 %v1293
    %1907 = vmatprep.subr.bf16.mxu0 %v1290
    %1908 = vmatpush2.bf16.msra.mxu0 %v1289
    %1909 = vmatprep.subr.bf16.mxu0 %v1286
    %1910 = vmatpush2.bf16.msra.mxu0 %v1285
    %1911 = vmatprep.subr.bf16.mxu0 %v1282
    %1912 = vmatpush2.bf16.msra.mxu0 %v1281
    %1913 = vmatprep.subr.bf16.mxu0 %v1278
    %1914 = vmatpush2.bf16.msra.mxu0 %v1277
    %1915 = vmatprep.subr.bf16.mxu0 %v1274
    %1916 = vmatpush2.bf16.msra.mxu0 %v1273
    %1917 = vmatprep.subr.bf16.mxu0 %v1270
    %1918 = vmatpush2.bf16.msra.mxu0 %v1269
    %1919 = vmatprep.subr.bf16.mxu0 %v1266
    %1920 = vmatpush2.bf16.msra.mxu0 %v1265
    %1921 = vmatprep.mubr.bf16.mxu0 %v140
    %1922 = vmatmul.mubr.bf16.gmra.mxu0 %v139
    %v1923 = vpop.f32.mrf.mxu0
    %v1924 = vadd.f32 %v1883, %v1923
    %v1925 = vpop.f32.mrf.mxu0
    %v1926 = vadd.f32 %v1885, %v1925
    %v1927 = vpop.f32.mrf.mxu0
    %v1928 = vpop.f32.mrf.mxu0
    %1929 = vdwg.mxu0
    %1930 = vmatprep.subr.bf16.mxu0 %v1326
    %1931 = vmatpush1.bf16.msra.mxu0 %v1325
    %1932 = vmatprep.subr.bf16.mxu0 %v1322
    %1933 = vmatpush1.bf16.msra.mxu0 %v1321
    %1934 = vmatprep.subr.bf16.mxu0 %v1318
    %1935 = vmatpush1.bf16.msra.mxu0 %v1317
    %1936 = vmatprep.subr.bf16.mxu0 %v1314
    %1937 = vmatpush1.bf16.msra.mxu0 %v1313
    %1938 = vmatprep.subr.bf16.mxu0 %v1310
    %1939 = vmatpush1.bf16.msra.mxu0 %v1309
    %1940 = vmatprep.subr.bf16.mxu0 %v1306
    %1941 = vmatpush1.bf16.msra.mxu0 %v1305
    %1942 = vmatprep.subr.bf16.mxu0 %v1302
    %1943 = vmatpush1.bf16.msra.mxu0 %v1301
    %1944 = vmatprep.subr.bf16.mxu0 %v1298
    %1945 = vmatpush1.bf16.msra.mxu0 %v1297
    %1946 = vmatprep.subr.bf16.mxu0 %v1358
    %1947 = vmatpush2.bf16.msra.mxu0 %v1357
    %1948 = vmatprep.subr.bf16.mxu0 %v1354
    %1949 = vmatpush2.bf16.msra.mxu0 %v1353
    %1950 = vmatprep.subr.bf16.mxu0 %v1350
    %1951 = vmatpush2.bf16.msra.mxu0 %v1349
    %1952 = vmatprep.subr.bf16.mxu0 %v1346
    %1953 = vmatpush2.bf16.msra.mxu0 %v1345
    %1954 = vmatprep.subr.bf16.mxu0 %v1342
    %1955 = vmatpush2.bf16.msra.mxu0 %v1341
    %1956 = vmatprep.subr.bf16.mxu0 %v1338
    %1957 = vmatpush2.bf16.msra.mxu0 %v1337
    %1958 = vmatprep.subr.bf16.mxu0 %v1334
    %1959 = vmatpush2.bf16.msra.mxu0 %v1333
    %1960 = vmatprep.subr.bf16.mxu0 %v1330
    %1961 = vmatpush2.bf16.msra.mxu0 %v1329
    %1962 = vmatprep.mubr.bf16.mxu0 %v142
    %1963 = vmatmul.mubr.bf16.gmra.mxu0 %v141
    %v1964 = vpop.f32.mrf.mxu0
    %v1965 = vadd.f32 %v1924, %v1964
    %v1966 = vpop.f32.mrf.mxu0
    %v1967 = vadd.f32 %v1926, %v1966
    %v1968 = vpop.f32.mrf.mxu0
    %v1969 = vpop.f32.mrf.mxu0
    %1970 = vdwg.mxu0
    %1971 = vmatprep.subr.bf16.mxu0 %v1390
    %1972 = vmatpush1.bf16.msra.mxu0 %v1389
    %1973 = vmatprep.subr.bf16.mxu0 %v1386
    %1974 = vmatpush1.bf16.msra.mxu0 %v1385
    %1975 = vmatprep.subr.bf16.mxu0 %v1382
    %1976 = vmatpush1.bf16.msra.mxu0 %v1381
    %1977 = vmatprep.subr.bf16.mxu0 %v1378
    %1978 = vmatpush1.bf16.msra.mxu0 %v1377
    %1979 = vmatprep.subr.bf16.mxu0 %v1374
    %1980 = vmatpush1.bf16.msra.mxu0 %v1373
    %1981 = vmatprep.subr.bf16.mxu0 %v1370
    %1982 = vmatpush1.bf16.msra.mxu0 %v1369
    %1983 = vmatprep.subr.bf16.mxu0 %v1366
    %1984 = vmatpush1.bf16.msra.mxu0 %v1365
    %1985 = vmatprep.subr.bf16.mxu0 %v1362
    %1986 = vmatpush1.bf16.msra.mxu0 %v1361
    %1987 = vmatprep.subr.bf16.mxu0 0
    %1988 = vmatpush2.bf16.msra.mxu0 0
    %1989 = vmatprep.subr.bf16.mxu0 %v1682
    %1990 = vmatpush2.bf16.msra.mxu0 %v1679
    %1991 = vmatprep.subr.bf16.mxu0 %v1414
    %1992 = vmatpush2.bf16.msra.mxu0 %v1413
    %1993 = vmatprep.subr.bf16.mxu0 %v1410
    %1994 = vmatpush2.bf16.msra.mxu0 %v1409
    %1995 = vmatprep.subr.bf16.mxu0 %v1406
    %1996 = vmatpush2.bf16.msra.mxu0 %v1405
    %1997 = vmatprep.subr.bf16.mxu0 %v1402
    %1998 = vmatpush2.bf16.msra.mxu0 %v1401
    %1999 = vmatprep.subr.bf16.mxu0 %v1398
    %2000 = vmatpush2.bf16.msra.mxu0 %v1397
    %2001 = vmatprep.subr.bf16.mxu0 %v1394
    %2002 = vmatpush2.bf16.msra.mxu0 %v1393
    %2003 = vmatprep.mubr.bf16.mxu0 %v1669
    %2004 = vmatmul.mubr.bf16.gmra.mxu0 %v143
    %v2005 = vpop.f32.mrf.mxu0
    %v2006 = vadd.f32 %v1965, %v2005
    %v2007 = vpop.f32.mrf.mxu0
    %v2008 = vadd.f32 %v1967, %v2007
    %v2009 = vpop.f32.mrf.mxu0
    %v2010 = vpop.f32.mrf.mxu0
    %2011 = vdwg.mxu0
    %v2012 = vmax.f32 %v1842, 0.0
    %v2013 = vmax.f32 %v1844, 0.0
    %v2014 = vmax.f32 %v2006, 0.0
    %v2015 = vmax.f32 %v2008, 0.0
    %v2016 = vpack.c.bf16 %v2012, %v2012
    %v2017 = vpack.c.bf16 %v2013, %v2013
    %v2018 = vpack.c.bf16 %v2014, %v2014
    %v2019 = vpack.c.bf16 %v2015, %v2015
    %v2020 = vld [vmem:[#allocation7] sm:$0xff]
    %v2021 = vld [vmem:[#allocation7 + $0x8] sm:$0xff]
    %v2022 = vld [vmem:[#allocation7 + $0x10] sm:$0xff]
    %v2023 = vld [vmem:[#allocation7 + $0x18] sm:$0xff]
    %v2024 = vld [vmem:[#allocation7 + $0x20] sm:$0xff]
    %v2025 = vld [vmem:[#allocation7 + $0x28] sm:$0xff]
    %v2026 = vld [vmem:[#allocation7 + $0x30] sm:$0xff]
    %v2027 = vld [vmem:[#allocation7 + $0x38] sm:$0xff]
    %v2028 = vld [vmem:[#allocation7 + $0x40] sm:$0xff]
    %v2029 = vld [vmem:[#allocation7 + $0x48] sm:$0xff]
    %v2030 = vld [vmem:[#allocation7 + $0x50] sm:$0xff]
    %v2031 = vld [vmem:[#allocation7 + $0x58] sm:$0xff]
    %v2032 = vld [vmem:[#allocation7 + $0x60] sm:$0xff]
    %v2033 = vld [vmem:[#allocation7 + $0x68] sm:$0xff]
    %v2034 = vld [vmem:[#allocation7 + $0x70] sm:$0xff]
    %v2035 = vld [vmem:[#allocation7 + $0x78] sm:$0xff]
    %v2036 = vld [vmem:[#allocation7 + $0x80] sm:$0xff]
    %v2037 = vld [vmem:[#allocation7 + $0x88] sm:$0xff]
    %v2038 = vld [vmem:[#allocation7 + $0x90] sm:$0xff]
    %v2039 = vld [vmem:[#allocation7 + $0x98] sm:$0xff]
    %v2040 = vld [vmem:[#allocation7 + $0xa0] sm:$0xff]
    %v2041 = vld [vmem:[#allocation7 + $0xa8] sm:$0xff]
    %v2042 = vld [vmem:[#allocation7 + $0xb0] sm:$0xff]
    %v2043 = vld [vmem:[#allocation7 + $0xb8] sm:$0xff]
    %v2044 = vld [vmem:[#allocation7 + $0xc0] sm:$0xff]
    %v2045 = vld [vmem:[#allocation7 + $0xc8] sm:$0xff]
    %v2046 = vld [vmem:[#allocation7 + $0xd0] sm:$0xff]
    %v2047 = vld [vmem:[#allocation7 + $0xd8] sm:$0xff]
    %v2048 = vld [vmem:[#allocation7 + $0xe0] sm:$0xff]
    %v2049 = vld [vmem:[#allocation7 + $0xe8] sm:$0xff]
    %v2050 = vld [vmem:[#allocation7 + $0xf0] sm:$0xff]
    %v2051 = vld [vmem:[#allocation7 + $0xf8] sm:$0xff]
    %v2052 = vld [vmem:[#allocation7 + $0x100] sm:$0xff]
    %v2053 = vld [vmem:[#allocation7 + $0x108] sm:$0xff]
    %v2054 = vld [vmem:[#allocation7 + $0x110] sm:$0xff]
    %v2055 = vld [vmem:[#allocation7 + $0x118] sm:$0xff]
    %v2056 = vld [vmem:[#allocation7 + $0x120] sm:$0xff]
    %v2057 = vld [vmem:[#allocation7 + $0x128] sm:$0xff]
    %v2058 = vld [vmem:[#allocation7 + $0x130] sm:$0xff]
    %v2059 = vld [vmem:[#allocation7 + $0x138] sm:$0xff]
    %v2060 = vld [vmem:[#allocation7 + $0x140] sm:$0xff]
    %v2061 = vld [vmem:[#allocation7 + $0x148] sm:$0xff]
    %v2062 = vld [vmem:[#allocation7 + $0x150] sm:$0xff]
    %v2063 = vld [vmem:[#allocation7 + $0x158] sm:$0xff]
    %v2064 = vld [vmem:[#allocation7 + $0x160] sm:$0xff]
    %v2065 = vld [vmem:[#allocation7 + $0x168] sm:$0xff]
    %v2066 = vld [vmem:[#allocation7 + $0x170] sm:$0xff]
    %v2067 = vld [vmem:[#allocation7 + $0x178] sm:$0xff]
    %v2068 = vld [vmem:[#allocation7 + $0x180] sm:$0xff]
    %v2069 = vld [vmem:[#allocation7 + $0x188] sm:$0xff]
    %v2070 = vld [vmem:[#allocation7 + $0x190] sm:$0xff]
    %v2071 = vld [vmem:[#allocation7 + $0x198] sm:$0xff]
    %v2072 = vld [vmem:[#allocation7 + $0x1a0] sm:$0xff]
    %v2073 = vld [vmem:[#allocation7 + $0x1a8] sm:$0xff]
    %v2074 = vld [vmem:[#allocation7 + $0x1b0] sm:$0xff]
    %v2075 = vld [vmem:[#allocation7 + $0x1b8] sm:$0xff]
    %v2076 = vld [vmem:[#allocation7 + $0x1c0] sm:$0xff]
    %v2077 = vld [vmem:[#allocation7 + $0x1c8] sm:$0xff]
    %v2078 = vld [vmem:[#allocation7 + $0x1d0] sm:$0xff]
    %v2079 = vld [vmem:[#allocation7 + $0x1d8] sm:$0xff]
    %v2080 = vld [vmem:[#allocation7 + $0x1e0] sm:$0xff]
    %v2081 = vld [vmem:[#allocation7 + $0x1e8] sm:$0xff]
    %v2082 = vld [vmem:[#allocation7 + $0x1f0] sm:$0xff]
    %v2083 = vld [vmem:[#allocation7 + $0x1f8] sm:$0xff]
    %v2084 = vld [vmem:[#allocation7 + $0x200] sm:$0xff]
    %v2085 = vld [vmem:[#allocation7 + $0x208] sm:$0xff]
    %v2086 = vld [vmem:[#allocation7 + $0x210] sm:$0xff]
    %v2087 = vld [vmem:[#allocation7 + $0x218] sm:$0xff]
    %v2088 = vld [vmem:[#allocation7 + $0x220] sm:$0xff]
    %v2089 = vld [vmem:[#allocation7 + $0x228] sm:$0xff]
    %v2090 = vld [vmem:[#allocation7 + $0x230] sm:$0xff]
    %v2091 = vld [vmem:[#allocation7 + $0x238] sm:$0xff]
    %v2092 = vld [vmem:[#allocation7 + $0x240] sm:$0xff]
    %v2093 = vld [vmem:[#allocation7 + $0x248] sm:$0xff]
    %v2094 = vld [vmem:[#allocation7 + $0x250] sm:$0xff]
    %v2095 = vld [vmem:[#allocation7 + $0x258] sm:$0xff]
    %v2096 = vld [vmem:[#allocation7 + $0x260] sm:$0xff]
    %v2097 = vld [vmem:[#allocation7 + $0x268] sm:$0xff]
    %v2098 = vld [vmem:[#allocation7 + $0x270] sm:$0xff]
    %v2099 = vld [vmem:[#allocation7 + $0x278] sm:$0xff]
    %v2100 = vld [vmem:[#allocation7 + $0x280] sm:$0xff]
    %v2101 = vld [vmem:[#allocation7 + $0x288] sm:$0xff]
    %v2102 = vld [vmem:[#allocation7 + $0x290] sm:$0xff]
    %v2103 = vld [vmem:[#allocation7 + $0x298] sm:$0xff]
    %v2104 = vld [vmem:[#allocation7 + $0x2a0] sm:$0xff]
    %v2105 = vld [vmem:[#allocation7 + $0x2a8] sm:$0xff]
    %v2106 = vld [vmem:[#allocation7 + $0x2b0] sm:$0xff]
    %v2107 = vld [vmem:[#allocation7 + $0x2b8] sm:$0xff]
    %v2108 = vld [vmem:[#allocation7 + $0x2c0] sm:$0xff]
    %v2109 = vld [vmem:[#allocation7 + $0x2c8] sm:$0xff]
    %v2110 = vld [vmem:[#allocation7 + $0x2d0] sm:$0xff]
    %v2111 = vld [vmem:[#allocation7 + $0x2d8] sm:$0xff]
    %v2112 = vld [vmem:[#allocation7 + $0x2e0] sm:$0xff]
    %v2113 = vld [vmem:[#allocation7 + $0x2e8] sm:$0xff]
    %v2114 = vld [vmem:[#allocation7 + $0x2f0] sm:$0xff]
    %v2115 = vld [vmem:[#allocation7 + $0x2f8] sm:$0xff]
    %v2116 = vld [vmem:[#allocation7 + $0x300] sm:$0xff]
    %v2117 = vld [vmem:[#allocation7 + $0x308] sm:$0xff]
    %v2118 = vld [vmem:[#allocation7 + $0x310] sm:$0xff]
    %v2119 = vld [vmem:[#allocation7 + $0x318] sm:$0xff]
    %v2120 = vld [vmem:[#allocation7 + $0x320] sm:$0xff]
    %v2121 = vld [vmem:[#allocation7 + $0x328] sm:$0xff]
    %v2122 = vld [vmem:[#allocation7 + $0x330] sm:$0xff]
    %v2123 = vld [vmem:[#allocation7 + $0x338] sm:$0xff]
    %v2124 = vld [vmem:[#allocation7 + $0x340] sm:$0xff]
    %v2125 = vld [vmem:[#allocation7 + $0x348] sm:$0xff]
    %v2126 = vld [vmem:[#allocation7 + $0x350] sm:$0xff]
    %v2127 = vld [vmem:[#allocation7 + $0x358] sm:$0xff]
    %v2128 = vld [vmem:[#allocation7 + $0x360] sm:$0xff]
    %v2129 = vld [vmem:[#allocation7 + $0x368] sm:$0xff]
    %v2130 = vld [vmem:[#allocation7 + $0x370] sm:$0xff]
    %v2131 = vld [vmem:[#allocation7 + $0x378] sm:$0xff]
    %v2132 = vld [vmem:[#allocation7 + $0x380] sm:$0xff]
    %v2133 = vld [vmem:[#allocation7 + $0x388] sm:$0xff]
    %v2134 = vld [vmem:[#allocation7 + $0x390] sm:$0xff]
    %v2135 = vld [vmem:[#allocation7 + $0x398] sm:$0xff]
    %v2136 = vld [vmem:[#allocation7 + $0x3a0] sm:$0xff]
    %v2137 = vld [vmem:[#allocation7 + $0x3a8] sm:$0xff]
    %v2138 = vld [vmem:[#allocation7 + $0x3b0] sm:$0xff]
    %v2139 = vld [vmem:[#allocation7 + $0x3b8] sm:$0xff]
    %v2140 = vld [vmem:[#allocation7 + $0x3c0] sm:$0xff]
    %v2141 = vld [vmem:[#allocation7 + $0x3c8] sm:$0xff]
    %v2142 = vld [vmem:[#allocation7 + $0x3d0] sm:$0xff]
    %v2143 = vld [vmem:[#allocation7 + $0x3d8] sm:$0xff]
    %v2144 = vld [vmem:[#allocation7 + $0x3e0] sm:$0xff]
    %v2145 = vld [vmem:[#allocation7 + $0x3e8] sm:$0xff]
    %v2146 = vld [vmem:[#allocation7 + $0x3f0] sm:$0xff]
    %v2147 = vld [vmem:[#allocation7 + $0x3f8] sm:$0xff]
    %v2148 = vld [vmem:[%s4] sm:$0xf]
    %v2150 = vlaneseq
    %v2151 = vshrl.u32 %v2150, 7
    %v2152 = vsub.s32 0, %v2151
    %v2153 = vrot.slane %v2148, %v2152
    %v2154 = vlaneseq
    %v2155 = vshrl.u32 %v2154, 7
    %v2156 = vsub.s32 1, %v2155
    %v2157 = vrot.slane %v2148, %v2156
    %v2158 = vlaneseq
    %v2159 = vshrl.u32 %v2158, 7
    %v2160 = vsub.s32 2, %v2159
    %v2161 = vrot.slane %v2148, %v2160
    %v2162 = vlaneseq
    %v2163 = vshrl.u32 %v2162, 7
    %v2164 = vsub.s32 3, %v2163
    %v2165 = vrot.slane %v2148, %v2164
    %v2298 = vunpack.c.l.b16 %v2020
    %v2299 = vunpack.c.h.b16 %v2020
    %v2300 = vunpack.c.l.b16 %v2021
    %v2301 = vunpack.c.h.b16 %v2021
    %v2302 = vunpack.c.l.b16 %v2022
    %v2303 = vunpack.c.h.b16 %v2022
    %v2304 = vunpack.c.l.b16 %v2023
    %v2305 = vunpack.c.h.b16 %v2023
    %v2306 = vunpack.c.l.b16 %v2024
    %v2307 = vunpack.c.h.b16 %v2024
    %v2308 = vunpack.c.l.b16 %v2025
    %v2309 = vunpack.c.h.b16 %v2025
    %v2310 = vunpack.c.l.b16 %v2026
    %v2311 = vunpack.c.h.b16 %v2026
    %v2312 = vunpack.c.l.b16 %v2027
    %v2313 = vunpack.c.h.b16 %v2027
    %v2314 = vunpack.c.l.b16 %v2028
    %v2315 = vunpack.c.h.b16 %v2028
    %v2316 = vunpack.c.l.b16 %v2029
    %v2317 = vunpack.c.h.b16 %v2029
    %v2318 = vunpack.c.l.b16 %v2030
    %v2319 = vunpack.c.h.b16 %v2030
    %v2320 = vunpack.c.l.b16 %v2031
    %v2321 = vunpack.c.h.b16 %v2031
    %v2322 = vunpack.c.l.b16 %v2032
    %v2323 = vunpack.c.h.b16 %v2032
    %v2324 = vunpack.c.l.b16 %v2033
    %v2325 = vunpack.c.h.b16 %v2033
    %v2326 = vunpack.c.l.b16 %v2034
    %v2327 = vunpack.c.h.b16 %v2034
    %v2328 = vunpack.c.l.b16 %v2035
    %v2329 = vunpack.c.h.b16 %v2035
    %v2330 = vunpack.c.l.b16 %v2036
    %v2331 = vunpack.c.h.b16 %v2036
    %v2332 = vunpack.c.l.b16 %v2037
    %v2333 = vunpack.c.h.b16 %v2037
    %v2334 = vunpack.c.l.b16 %v2038
    %v2335 = vunpack.c.h.b16 %v2038
    %v2336 = vunpack.c.l.b16 %v2039
    %v2337 = vunpack.c.h.b16 %v2039
    %v2338 = vunpack.c.l.b16 %v2040
    %v2339 = vunpack.c.h.b16 %v2040
    %v2340 = vunpack.c.l.b16 %v2041
    %v2341 = vunpack.c.h.b16 %v2041
    %v2342 = vunpack.c.l.b16 %v2042
    %v2343 = vunpack.c.h.b16 %v2042
    %v2344 = vunpack.c.l.b16 %v2043
    %v2345 = vunpack.c.h.b16 %v2043
    %v2346 = vunpack.c.l.b16 %v2044
    %v2347 = vunpack.c.h.b16 %v2044
    %v2348 = vunpack.c.l.b16 %v2045
    %v2349 = vunpack.c.h.b16 %v2045
    %v2350 = vunpack.c.l.b16 %v2046
    %v2351 = vunpack.c.h.b16 %v2046
    %v2352 = vunpack.c.l.b16 %v2047
    %v2353 = vunpack.c.h.b16 %v2047
    %v2354 = vunpack.c.l.b16 %v2048
    %v2355 = vunpack.c.h.b16 %v2048
    %v2356 = vunpack.c.l.b16 %v2049
    %v2357 = vunpack.c.h.b16 %v2049
    %v2358 = vunpack.c.l.b16 %v2050
    %v2359 = vunpack.c.h.b16 %v2050
    %v2360 = vunpack.c.l.b16 %v2051
    %v2361 = vunpack.c.h.b16 %v2051
    %v2362 = vunpack.c.l.b16 %v2052
    %v2363 = vunpack.c.h.b16 %v2052
    %v2364 = vunpack.c.l.b16 %v2053
    %v2365 = vunpack.c.h.b16 %v2053
    %v2366 = vunpack.c.l.b16 %v2054
    %v2367 = vunpack.c.h.b16 %v2054
    %v2368 = vunpack.c.l.b16 %v2055
    %v2369 = vunpack.c.h.b16 %v2055
    %v2370 = vunpack.c.l.b16 %v2056
    %v2371 = vunpack.c.h.b16 %v2056
    %v2372 = vunpack.c.l.b16 %v2057
    %v2373 = vunpack.c.h.b16 %v2057
    %v2374 = vunpack.c.l.b16 %v2058
    %v2375 = vunpack.c.h.b16 %v2058
    %v2376 = vunpack.c.l.b16 %v2059
    %v2377 = vunpack.c.h.b16 %v2059
    %v2378 = vunpack.c.l.b16 %v2060
    %v2379 = vunpack.c.h.b16 %v2060
    %v2380 = vunpack.c.l.b16 %v2061
    %v2381 = vunpack.c.h.b16 %v2061
    %v2382 = vunpack.c.l.b16 %v2062
    %v2383 = vunpack.c.h.b16 %v2062
    %v2384 = vunpack.c.l.b16 %v2063
    %v2385 = vunpack.c.h.b16 %v2063
    %v2386 = vunpack.c.l.b16 %v2064
    %v2387 = vunpack.c.h.b16 %v2064
    %v2388 = vunpack.c.l.b16 %v2065
    %v2389 = vunpack.c.h.b16 %v2065
    %v2390 = vunpack.c.l.b16 %v2066
    %v2391 = vunpack.c.h.b16 %v2066
    %v2392 = vunpack.c.l.b16 %v2067
    %v2393 = vunpack.c.h.b16 %v2067
    %v2394 = vunpack.c.l.b16 %v2068
    %v2395 = vunpack.c.h.b16 %v2068
    %v2396 = vunpack.c.l.b16 %v2069
    %v2397 = vunpack.c.h.b16 %v2069
    %v2398 = vunpack.c.l.b16 %v2070
    %v2399 = vunpack.c.h.b16 %v2070
    %v2400 = vunpack.c.l.b16 %v2071
    %v2401 = vunpack.c.h.b16 %v2071
    %v2402 = vunpack.c.l.b16 %v2072
    %v2403 = vunpack.c.h.b16 %v2072
    %v2404 = vunpack.c.l.b16 %v2073
    %v2405 = vunpack.c.h.b16 %v2073
    %v2406 = vunpack.c.l.b16 %v2074
    %v2407 = vunpack.c.h.b16 %v2074
    %v2408 = vunpack.c.l.b16 %v2075
    %v2409 = vunpack.c.h.b16 %v2075
    %v2410 = vunpack.c.l.b16 %v2076
    %v2411 = vunpack.c.h.b16 %v2076
    %v2412 = vunpack.c.l.b16 %v2077
    %v2413 = vunpack.c.h.b16 %v2077
    %v2414 = vunpack.c.l.b16 %v2078
    %v2415 = vunpack.c.h.b16 %v2078
    %v2416 = vunpack.c.l.b16 %v2079
    %v2417 = vunpack.c.h.b16 %v2079
    %v2418 = vunpack.c.l.b16 %v2080
    %v2419 = vunpack.c.h.b16 %v2080
    %v2420 = vunpack.c.l.b16 %v2081
    %v2421 = vunpack.c.h.b16 %v2081
    %v2422 = vunpack.c.l.b16 %v2082
    %v2423 = vunpack.c.h.b16 %v2082
    %v2424 = vunpack.c.l.b16 %v2083
    %v2425 = vunpack.c.h.b16 %v2083
    %v2426 = vunpack.c.l.b16 %v2084
    %v2427 = vunpack.c.h.b16 %v2084
    %v2428 = vunpack.c.l.b16 %v2085
    %v2429 = vunpack.c.h.b16 %v2085
    %v2430 = vunpack.c.l.b16 %v2086
    %v2431 = vunpack.c.h.b16 %v2086
    %v2432 = vunpack.c.l.b16 %v2087
    %v2433 = vunpack.c.h.b16 %v2087
    %v2434 = vunpack.c.l.b16 %v2088
    %v2435 = vunpack.c.h.b16 %v2088
    %v2436 = vunpack.c.l.b16 %v2089
    %v2437 = vunpack.c.h.b16 %v2089
    %v2438 = vunpack.c.l.b16 %v2090
    %v2439 = vunpack.c.h.b16 %v2090
    %v2440 = vunpack.c.l.b16 %v2091
    %v2441 = vunpack.c.h.b16 %v2091
    %v2442 = vunpack.c.l.b16 %v2092
    %v2443 = vunpack.c.h.b16 %v2092
    %v2444 = vunpack.c.l.b16 %v2093
    %v2445 = vunpack.c.h.b16 %v2093
    %v2446 = vunpack.c.l.b16 %v2094
    %v2447 = vunpack.c.h.b16 %v2094
    %v2448 = vunpack.c.l.b16 %v2095
    %v2449 = vunpack.c.h.b16 %v2095
    %v2450 = vunpack.c.l.b16 %v2096
    %v2451 = vunpack.c.h.b16 %v2096
    %v2452 = vunpack.c.l.b16 %v2097
    %v2453 = vunpack.c.h.b16 %v2097
    %v2454 = vunpack.c.l.b16 %v2098
    %v2455 = vunpack.c.h.b16 %v2098
    %v2456 = vunpack.c.l.b16 %v2099
    %v2457 = vunpack.c.h.b16 %v2099
    %v2458 = vunpack.c.l.b16 %v2100
    %v2459 = vunpack.c.h.b16 %v2100
    %v2460 = vunpack.c.l.b16 %v2101
    %v2461 = vunpack.c.h.b16 %v2101
    %v2462 = vunpack.c.l.b16 %v2102
    %v2463 = vunpack.c.h.b16 %v2102
    %v2464 = vunpack.c.l.b16 %v2103
    %v2465 = vunpack.c.h.b16 %v2103
    %v2466 = vunpack.c.l.b16 %v2104
    %v2467 = vunpack.c.h.b16 %v2104
    %v2468 = vunpack.c.l.b16 %v2105
    %v2469 = vunpack.c.h.b16 %v2105
    %v2470 = vunpack.c.l.b16 %v2106
    %v2471 = vunpack.c.h.b16 %v2106
    %v2472 = vunpack.c.l.b16 %v2107
    %v2473 = vunpack.c.h.b16 %v2107
    %v2474 = vunpack.c.l.b16 %v2108
    %v2475 = vunpack.c.h.b16 %v2108
    %v2476 = vunpack.c.l.b16 %v2109
    %v2477 = vunpack.c.h.b16 %v2109
    %v2478 = vunpack.c.l.b16 %v2110
    %v2479 = vunpack.c.h.b16 %v2110
    %v2480 = vunpack.c.l.b16 %v2111
    %v2481 = vunpack.c.h.b16 %v2111
    %v2482 = vunpack.c.l.b16 %v2112
    %v2483 = vunpack.c.h.b16 %v2112
    %v2484 = vunpack.c.l.b16 %v2113
    %v2485 = vunpack.c.h.b16 %v2113
    %v2486 = vunpack.c.l.b16 %v2114
    %v2487 = vunpack.c.h.b16 %v2114
    %v2488 = vunpack.c.l.b16 %v2115
    %v2489 = vunpack.c.h.b16 %v2115
    %v2490 = vunpack.c.l.b16 %v2116
    %v2491 = vunpack.c.h.b16 %v2116
    %v2492 = vunpack.c.l.b16 %v2117
    %v2493 = vunpack.c.h.b16 %v2117
    %v2494 = vunpack.c.l.b16 %v2118
    %v2495 = vunpack.c.h.b16 %v2118
    %v2496 = vunpack.c.l.b16 %v2119
    %v2497 = vunpack.c.h.b16 %v2119
    %v2498 = vunpack.c.l.b16 %v2120
    %v2499 = vunpack.c.h.b16 %v2120
    %v2500 = vunpack.c.l.b16 %v2121
    %v2501 = vunpack.c.h.b16 %v2121
    %v2502 = vunpack.c.l.b16 %v2122
    %v2503 = vunpack.c.h.b16 %v2122
    %v2504 = vunpack.c.l.b16 %v2123
    %v2505 = vunpack.c.h.b16 %v2123
    %v2506 = vunpack.c.l.b16 %v2124
    %v2507 = vunpack.c.h.b16 %v2124
    %v2508 = vunpack.c.l.b16 %v2125
    %v2509 = vunpack.c.h.b16 %v2125
    %v2510 = vunpack.c.l.b16 %v2126
    %v2511 = vunpack.c.h.b16 %v2126
    %v2512 = vunpack.c.l.b16 %v2127
    %v2513 = vunpack.c.h.b16 %v2127
    %v2514 = vunpack.c.l.b16 %v2128
    %v2515 = vunpack.c.h.b16 %v2128
    %v2516 = vunpack.c.l.b16 %v2129
    %v2517 = vunpack.c.h.b16 %v2129
    %v2518 = vunpack.c.l.b16 %v2130
    %v2519 = vunpack.c.h.b16 %v2130
    %v2520 = vunpack.c.l.b16 %v2131
    %v2521 = vunpack.c.h.b16 %v2131
    %v2522 = vunpack.c.l.b16 %v2132
    %v2523 = vunpack.c.h.b16 %v2132
    %v2524 = vunpack.c.l.b16 %v2133
    %v2525 = vunpack.c.h.b16 %v2133
    %v2526 = vunpack.c.l.b16 %v2134
    %v2527 = vunpack.c.h.b16 %v2134
    %v2528 = vunpack.c.l.b16 %v2135
    %v2529 = vunpack.c.h.b16 %v2135
    %v2530 = vunpack.c.l.b16 %v2136
    %v2531 = vunpack.c.h.b16 %v2136
    %v2532 = vunpack.c.l.b16 %v2137
    %v2533 = vunpack.c.h.b16 %v2137
    %v2534 = vunpack.c.l.b16 %v2138
    %v2535 = vunpack.c.h.b16 %v2138
    %v2536 = vunpack.c.l.b16 %v2139
    %v2537 = vunpack.c.h.b16 %v2139
    %v2538 = vunpack.c.l.b16 %v2140
    %v2539 = vunpack.c.h.b16 %v2140
    %v2540 = vunpack.c.l.b16 %v2141
    %v2541 = vunpack.c.h.b16 %v2141
    %v2542 = vunpack.c.l.b16 %v2142
    %v2543 = vunpack.c.h.b16 %v2142
    %v2544 = vunpack.c.l.b16 %v2143
    %v2545 = vunpack.c.h.b16 %v2143
    %v2546 = vunpack.c.l.b16 %v2144
    %v2547 = vunpack.c.h.b16 %v2144
    %v2548 = vunpack.c.l.b16 %v2145
    %v2549 = vunpack.c.h.b16 %v2145
    %v2550 = vunpack.c.l.b16 %v2146
    %v2551 = vunpack.c.h.b16 %v2146
    %v2552 = vunpack.c.l.b16 %v2147
    %v2553 = vunpack.c.h.b16 %v2147
    %v2554 = vpack.c.b16 %v2302, %v2298
    %v2555 = vpack.c.b16 %v2303, %v2299
    %v2556 = vpack.c.b16 %v2304, %v2300
    %v2557 = vpack.c.b16 %v2305, %v2301
    %v2558 = vpack.c.b16 %v2310, %v2306
    %v2559 = vpack.c.b16 %v2311, %v2307
    %v2560 = vpack.c.b16 %v2312, %v2308
    %v2561 = vpack.c.b16 %v2313, %v2309
    %v2562 = vpack.c.b16 %v2318, %v2314
    %v2563 = vpack.c.b16 %v2319, %v2315
    %v2564 = vpack.c.b16 %v2320, %v2316
    %v2565 = vpack.c.b16 %v2321, %v2317
    %v2566 = vpack.c.b16 %v2326, %v2322
    %v2567 = vpack.c.b16 %v2327, %v2323
    %v2568 = vpack.c.b16 %v2328, %v2324
    %v2569 = vpack.c.b16 %v2329, %v2325
    %v2570 = vpack.c.b16 %v2334, %v2330
    %v2571 = vpack.c.b16 %v2335, %v2331
    %v2572 = vpack.c.b16 %v2336, %v2332
    %v2573 = vpack.c.b16 %v2337, %v2333
    %v2574 = vpack.c.b16 %v2342, %v2338
    %v2575 = vpack.c.b16 %v2343, %v2339
    %v2576 = vpack.c.b16 %v2344, %v2340
    %v2577 = vpack.c.b16 %v2345, %v2341
    %v2578 = vpack.c.b16 %v2350, %v2346
    %v2579 = vpack.c.b16 %v2351, %v2347
    %v2580 = vpack.c.b16 %v2352, %v2348
    %v2581 = vpack.c.b16 %v2353, %v2349
    %v2582 = vpack.c.b16 %v2358, %v2354
    %v2583 = vpack.c.b16 %v2359, %v2355
    %v2584 = vpack.c.b16 %v2360, %v2356
    %v2585 = vpack.c.b16 %v2361, %v2357
    %v2586 = vpack.c.b16 %v2366, %v2362
    %v2587 = vpack.c.b16 %v2367, %v2363
    %v2588 = vpack.c.b16 %v2368, %v2364
    %v2589 = vpack.c.b16 %v2369, %v2365
    %v2590 = vpack.c.b16 %v2374, %v2370
    %v2591 = vpack.c.b16 %v2375, %v2371
    %v2592 = vpack.c.b16 %v2376, %v2372
    %v2593 = vpack.c.b16 %v2377, %v2373
    %v2594 = vpack.c.b16 %v2382, %v2378
    %v2595 = vpack.c.b16 %v2383, %v2379
    %v2596 = vpack.c.b16 %v2384, %v2380
    %v2597 = vpack.c.b16 %v2385, %v2381
    %v2598 = vpack.c.b16 %v2390, %v2386
    %v2599 = vpack.c.b16 %v2391, %v2387
    %v2600 = vpack.c.b16 %v2392, %v2388
    %v2601 = vpack.c.b16 %v2393, %v2389
    %v2602 = vpack.c.b16 %v2398, %v2394
    %v2603 = vpack.c.b16 %v2399, %v2395
    %v2604 = vpack.c.b16 %v2400, %v2396
    %v2605 = vpack.c.b16 %v2401, %v2397
    %v2606 = vpack.c.b16 %v2406, %v2402
    %v2607 = vpack.c.b16 %v2407, %v2403
    %v2608 = vpack.c.b16 %v2408, %v2404
    %v2609 = vpack.c.b16 %v2409, %v2405
    %v2610 = vpack.c.b16 %v2414, %v2410
    %v2611 = vpack.c.b16 %v2415, %v2411
    %v2612 = vpack.c.b16 %v2416, %v2412
    %v2613 = vpack.c.b16 %v2417, %v2413
    %v2614 = vpack.c.b16 %v2422, %v2418
    %v2615 = vpack.c.b16 %v2423, %v2419
    %v2616 = vpack.c.b16 %v2424, %v2420
    %v2617 = vpack.c.b16 %v2425, %v2421
    %v2618 = vpack.c.b16 %v2430, %v2426
    %v2619 = vpack.c.b16 %v2431, %v2427
    %v2620 = vpack.c.b16 %v2432, %v2428
    %v2621 = vpack.c.b16 %v2433, %v2429
    %v2622 = vpack.c.b16 %v2438, %v2434
    %v2623 = vpack.c.b16 %v2439, %v2435
    %v2624 = vpack.c.b16 %v2440, %v2436
    %v2625 = vpack.c.b16 %v2441, %v2437
    %v2626 = vpack.c.b16 %v2446, %v2442
    %v2627 = vpack.c.b16 %v2447, %v2443
    %v2628 = vpack.c.b16 %v2448, %v2444
    %v2629 = vpack.c.b16 %v2449, %v2445
    %v2630 = vpack.c.b16 %v2454, %v2450
    %v2631 = vpack.c.b16 %v2455, %v2451
    %v2632 = vpack.c.b16 %v2456, %v2452
    %v2633 = vpack.c.b16 %v2457, %v2453
    %v2634 = vpack.c.b16 %v2462, %v2458
    %v2635 = vpack.c.b16 %v2463, %v2459
    %v2636 = vpack.c.b16 %v2464, %v2460
    %v2637 = vpack.c.b16 %v2465, %v2461
    %v2638 = vpack.c.b16 %v2470, %v2466
    %v2639 = vpack.c.b16 %v2471, %v2467
    %v2640 = vpack.c.b16 %v2472, %v2468
    %v2641 = vpack.c.b16 %v2473, %v2469
    %v2642 = vpack.c.b16 %v2478, %v2474
    %v2643 = vpack.c.b16 %v2479, %v2475
    %v2644 = vpack.c.b16 %v2480, %v2476
    %v2645 = vpack.c.b16 %v2481, %v2477
    %v2646 = vpack.c.b16 %v2486, %v2482
    %v2647 = vpack.c.b16 %v2487, %v2483
    %v2648 = vpack.c.b16 %v2488, %v2484
    %v2649 = vpack.c.b16 %v2489, %v2485
    %v2650 = vpack.c.b16 %v2494, %v2490
    %v2651 = vpack.c.b16 %v2495, %v2491
    %v2652 = vpack.c.b16 %v2496, %v2492
    %v2653 = vpack.c.b16 %v2497, %v2493
    %v2654 = vpack.c.b16 %v2502, %v2498
    %v2655 = vpack.c.b16 %v2503, %v2499
    %v2656 = vpack.c.b16 %v2504, %v2500
    %v2657 = vpack.c.b16 %v2505, %v2501
    %v2658 = vpack.c.b16 %v2510, %v2506
    %v2659 = vpack.c.b16 %v2511, %v2507
    %v2660 = vpack.c.b16 %v2512, %v2508
    %v2661 = vpack.c.b16 %v2513, %v2509
    %v2662 = vpack.c.b16 %v2518, %v2514
    %v2663 = vpack.c.b16 %v2519, %v2515
    %v2664 = vpack.c.b16 %v2520, %v2516
    %v2665 = vpack.c.b16 %v2521, %v2517
    %v2666 = vpack.c.b16 %v2526, %v2522
    %v2667 = vpack.c.b16 %v2527, %v2523
    %v2668 = vpack.c.b16 %v2528, %v2524
    %v2669 = vpack.c.b16 %v2529, %v2525
    %v2670 = vpack.c.b16 %v2534, %v2530
    %v2671 = vpack.c.b16 %v2535, %v2531
    %v2672 = vpack.c.b16 %v2536, %v2532
    %v2673 = vpack.c.b16 %v2537, %v2533
    %v2674 = vpack.c.b16 %v2542, %v2538
    %v2675 = vpack.c.b16 %v2543, %v2539
    %v2676 = vpack.c.b16 %v2544, %v2540
    %v2677 = vpack.c.b16 %v2545, %v2541
    %v2678 = vpack.c.b16 %v2550, %v2546
    %v2679 = vpack.c.b16 %v2551, %v2547
    %v2680 = vpack.c.b16 %v2552, %v2548
    %v2681 = vpack.c.b16 %v2553, %v2549
    %2810 = vmatprep.subr.bf16.mxu0 %v2583
    %2811 = vmatpush1.bf16.msra.mxu0 %v2582
    %2812 = vmatprep.subr.bf16.mxu0 %v2579
    %2813 = vmatpush1.bf16.msra.mxu0 %v2578
    %2814 = vmatprep.subr.bf16.mxu0 %v2575
    %2815 = vmatpush1.bf16.msra.mxu0 %v2574
    %2816 = vmatprep.subr.bf16.mxu0 %v2571
    %2817 = vmatpush1.bf16.msra.mxu0 %v2570
    %2818 = vmatprep.subr.bf16.mxu0 %v2567
    %2819 = vmatpush1.bf16.msra.mxu0 %v2566
    %2820 = vmatprep.subr.bf16.mxu0 %v2563
    %2821 = vmatpush1.bf16.msra.mxu0 %v2562
    %2822 = vmatprep.subr.bf16.mxu0 %v2559
    %2823 = vmatpush1.bf16.msra.mxu0 %v2558
    %2824 = vmatprep.subr.bf16.mxu0 %v2555
    %2825 = vmatpush1.bf16.msra.mxu0 %v2554
    %2826 = vmatprep.subr.bf16.mxu0 %v2615
    %2827 = vmatpush2.bf16.msra.mxu0 %v2614
    %2828 = vmatprep.subr.bf16.mxu0 %v2611
    %2829 = vmatpush2.bf16.msra.mxu0 %v2610
    %2830 = vmatprep.subr.bf16.mxu0 %v2607
    %2831 = vmatpush2.bf16.msra.mxu0 %v2606
    %2832 = vmatprep.subr.bf16.mxu0 %v2603
    %2833 = vmatpush2.bf16.msra.mxu0 %v2602
    %2834 = vmatprep.subr.bf16.mxu0 %v2599
    %2835 = vmatpush2.bf16.msra.mxu0 %v2598
    %2836 = vmatprep.subr.bf16.mxu0 %v2595
    %2837 = vmatpush2.bf16.msra.mxu0 %v2594
    %2838 = vmatprep.subr.bf16.mxu0 %v2591
    %2839 = vmatpush2.bf16.msra.mxu0 %v2590
    %2840 = vmatprep.subr.bf16.mxu0 %v2587
    %2841 = vmatpush2.bf16.msra.mxu0 %v2586
    %2842 = vmatprep.mubr.bf16.mxu0 %v2017
    %2843 = vmatmul.mubr.bf16.gmra.mxu0 %v2016
    %v2844 = vpop.f32.mrf.mxu0
    %v2845 = vadd.f32 %v2153, %v2844
    %v2846 = vpop.f32.mrf.mxu0
    %v2847 = vadd.f32 %v2157, %v2846
    %v2848 = vpop.f32.mrf.mxu0
    %v2849 = vpop.f32.mrf.mxu0
    %2850 = vdwg.mxu0
    %2851 = vmatprep.subr.bf16.mxu0 %v2647
    %2852 = vmatpush1.bf16.msra.mxu0 %v2646
    %2853 = vmatprep.subr.bf16.mxu0 %v2643
    %2854 = vmatpush1.bf16.msra.mxu0 %v2642
    %2855 = vmatprep.subr.bf16.mxu0 %v2639
    %2856 = vmatpush1.bf16.msra.mxu0 %v2638
    %2857 = vmatprep.subr.bf16.mxu0 %v2635
    %2858 = vmatpush1.bf16.msra.mxu0 %v2634
    %2859 = vmatprep.subr.bf16.mxu0 %v2631
    %2860 = vmatpush1.bf16.msra.mxu0 %v2630
    %2861 = vmatprep.subr.bf16.mxu0 %v2627
    %2862 = vmatpush1.bf16.msra.mxu0 %v2626
    %2863 = vmatprep.subr.bf16.mxu0 %v2623
    %2864 = vmatpush1.bf16.msra.mxu0 %v2622
    %2865 = vmatprep.subr.bf16.mxu0 %v2619
    %2866 = vmatpush1.bf16.msra.mxu0 %v2618
    %2867 = vmatprep.subr.bf16.mxu0 %v2679
    %2868 = vmatpush2.bf16.msra.mxu0 %v2678
    %2869 = vmatprep.subr.bf16.mxu0 %v2675
    %2870 = vmatpush2.bf16.msra.mxu0 %v2674
    %2871 = vmatprep.subr.bf16.mxu0 %v2671
    %2872 = vmatpush2.bf16.msra.mxu0 %v2670
    %2873 = vmatprep.subr.bf16.mxu0 %v2667
    %2874 = vmatpush2.bf16.msra.mxu0 %v2666
    %2875 = vmatprep.subr.bf16.mxu0 %v2663
    %2876 = vmatpush2.bf16.msra.mxu0 %v2662
    %2877 = vmatprep.subr.bf16.mxu0 %v2659
    %2878 = vmatpush2.bf16.msra.mxu0 %v2658
    %2879 = vmatprep.subr.bf16.mxu0 %v2655
    %2880 = vmatpush2.bf16.msra.mxu0 %v2654
    %2881 = vmatprep.subr.bf16.mxu0 %v2651
    %2882 = vmatpush2.bf16.msra.mxu0 %v2650
    %2883 = vmatprep.mubr.bf16.mxu0 %v2019
    %2884 = vmatmul.mubr.bf16.gmra.mxu0 %v2018
    %v2885 = vpop.f32.mrf.mxu0
    %v2886 = vadd.f32 %v2845, %v2885
    %v2887 = vpop.f32.mrf.mxu0
    %v2888 = vadd.f32 %v2847, %v2887
    %v2889 = vpop.f32.mrf.mxu0
    %v2890 = vpop.f32.mrf.mxu0
    %2891 = vdwg.mxu0
    %2892 = vmatprep.subr.bf16.mxu0 %v2585
    %2893 = vmatpush1.bf16.msra.mxu0 %v2584
    %2894 = vmatprep.subr.bf16.mxu0 %v2581
    %2895 = vmatpush1.bf16.msra.mxu0 %v2580
    %2896 = vmatprep.subr.bf16.mxu0 %v2577
    %2897 = vmatpush1.bf16.msra.mxu0 %v2576
    %2898 = vmatprep.subr.bf16.mxu0 %v2573
    %2899 = vmatpush1.bf16.msra.mxu0 %v2572
    %2900 = vmatprep.subr.bf16.mxu0 %v2569
    %2901 = vmatpush1.bf16.msra.mxu0 %v2568
    %2902 = vmatprep.subr.bf16.mxu0 %v2565
    %2903 = vmatpush1.bf16.msra.mxu0 %v2564
    %2904 = vmatprep.subr.bf16.mxu0 %v2561
    %2905 = vmatpush1.bf16.msra.mxu0 %v2560
    %2906 = vmatprep.subr.bf16.mxu0 %v2557
    %2907 = vmatpush1.bf16.msra.mxu0 %v2556
    %2908 = vmatprep.subr.bf16.mxu0 %v2617
    %2909 = vmatpush2.bf16.msra.mxu0 %v2616
    %2910 = vmatprep.subr.bf16.mxu0 %v2613
    %2911 = vmatpush2.bf16.msra.mxu0 %v2612
    %2912 = vmatprep.subr.bf16.mxu0 %v2609
    %2913 = vmatpush2.bf16.msra.mxu0 %v2608
    %2914 = vmatprep.subr.bf16.mxu0 %v2605
    %2915 = vmatpush2.bf16.msra.mxu0 %v2604
    %2916 = vmatprep.subr.bf16.mxu0 %v2601
    %2917 = vmatpush2.bf16.msra.mxu0 %v2600
    %2918 = vmatprep.subr.bf16.mxu0 %v2597
    %2919 = vmatpush2.bf16.msra.mxu0 %v2596
    %2920 = vmatprep.subr.bf16.mxu0 %v2593
    %2921 = vmatpush2.bf16.msra.mxu0 %v2592
    %2922 = vmatprep.subr.bf16.mxu0 %v2589
    %2923 = vmatpush2.bf16.msra.mxu0 %v2588
    %2924 = vmatprep.mubr.bf16.mxu0 %v2017
    %2925 = vmatmul.mubr.bf16.gmra.mxu0 %v2016
    %v2926 = vpop.f32.mrf.mxu0
    %v2927 = vadd.f32 %v2161, %v2926
    %v2928 = vpop.f32.mrf.mxu0
    %v2929 = vadd.f32 %v2165, %v2928
    %v2930 = vpop.f32.mrf.mxu0
    %v2931 = vpop.f32.mrf.mxu0
    %2932 = vdwg.mxu0
    %2933 = vmatprep.subr.bf16.mxu0 %v2649
    %2934 = vmatpush1.bf16.msra.mxu0 %v2648
    %2935 = vmatprep.subr.bf16.mxu0 %v2645
    %2936 = vmatpush1.bf16.msra.mxu0 %v2644
    %2937 = vmatprep.subr.bf16.mxu0 %v2641
    %2938 = vmatpush1.bf16.msra.mxu0 %v2640
    %2939 = vmatprep.subr.bf16.mxu0 %v2637
    %2940 = vmatpush1.bf16.msra.mxu0 %v2636
    %2941 = vmatprep.subr.bf16.mxu0 %v2633
    %2942 = vmatpush1.bf16.msra.mxu0 %v2632
    %2943 = vmatprep.subr.bf16.mxu0 %v2629
    %2944 = vmatpush1.bf16.msra.mxu0 %v2628
    %2945 = vmatprep.subr.bf16.mxu0 %v2625
    %2946 = vmatpush1.bf16.msra.mxu0 %v2624
    %2947 = vmatprep.subr.bf16.mxu0 %v2621
    %2948 = vmatpush1.bf16.msra.mxu0 %v2620
    %2949 = vmatprep.subr.bf16.mxu0 %v2681
    %2950 = vmatpush2.bf16.msra.mxu0 %v2680
    %2951 = vmatprep.subr.bf16.mxu0 %v2677
    %2952 = vmatpush2.bf16.msra.mxu0 %v2676
    %2953 = vmatprep.subr.bf16.mxu0 %v2673
    %2954 = vmatpush2.bf16.msra.mxu0 %v2672
    %2955 = vmatprep.subr.bf16.mxu0 %v2669
    %2956 = vmatpush2.bf16.msra.mxu0 %v2668
    %2957 = vmatprep.subr.bf16.mxu0 %v2665
    %2958 = vmatpush2.bf16.msra.mxu0 %v2664
    %2959 = vmatprep.subr.bf16.mxu0 %v2661
    %2960 = vmatpush2.bf16.msra.mxu0 %v2660
    %2961 = vmatprep.subr.bf16.mxu0 %v2657
    %2962 = vmatpush2.bf16.msra.mxu0 %v2656
    %2963 = vmatprep.subr.bf16.mxu0 %v2653
    %2964 = vmatpush2.bf16.msra.mxu0 %v2652
    %2965 = vmatprep.mubr.bf16.mxu0 %v2019
    %2966 = vmatmul.mubr.bf16.gmra.mxu0 %v2018
    %v2967 = vpop.f32.mrf.mxu0
    %v2968 = vadd.f32 %v2927, %v2967
    %v2969 = vpop.f32.mrf.mxu0
    %v2970 = vadd.f32 %v2929, %v2969
    %v2971 = vpop.f32.mrf.mxu0
    %v2972 = vpop.f32.mrf.mxu0
    %2973 = vdwg.mxu0
    %v2974 = vmax.f32 %v2886, 0.0
    %v2975 = vmax.f32 %v2888, 0.0
    %v2976 = vmax.f32 %v2968, 0.0
    %v2977 = vmax.f32 %v2970, 0.0
    %v2978 = vpack.c.bf16 %v2974, %v2974
    %v2979 = vpack.c.bf16 %v2975, %v2975
    %v2980 = vpack.c.bf16 %v2976, %v2976
    %v2981 = vpack.c.bf16 %v2977, %v2977
    %v2982 = vld [vmem:[#allocation9] sm:$0xf]
    %v2983 = vld [vmem:[#allocation9 + $0x4] sm:$0xf]
    %v2984 = vld [vmem:[#allocation9 + $0x8] sm:$0xf]
    %v2985 = vld [vmem:[#allocation9 + $0xc] sm:$0xf]
    %v2986 = vld [vmem:[#allocation9 + $0x10] sm:$0xf]
    %v2987 = vld [vmem:[#allocation9 + $0x14] sm:$0xf]
    %v2988 = vld [vmem:[#allocation9 + $0x18] sm:$0xf]
    %v2989 = vld [vmem:[#allocation9 + $0x1c] sm:$0xf]
    %v2990 = vld [vmem:[#allocation9 + $0x20] sm:$0xf]
    %v2991 = vld [vmem:[#allocation9 + $0x24] sm:$0xf]
    %v2992 = vld [vmem:[#allocation9 + $0x28] sm:$0xf]
    %v2993 = vld [vmem:[#allocation9 + $0x2c] sm:$0xf]
    %v2994 = vld [vmem:[#allocation9 + $0x30] sm:$0xf]
    %v2995 = vld [vmem:[#allocation9 + $0x34] sm:$0xf]
    %v2996 = vld [vmem:[#allocation9 + $0x38] sm:$0xf]
    %v2997 = vld [vmem:[#allocation9 + $0x3c] sm:$0xf]
    %v2998 = vld [vmem:[#allocation9 + $0x40] sm:$0xf]
    %v2999 = vld [vmem:[#allocation9 + $0x44] sm:$0xf]
    %v3000 = vld [vmem:[#allocation9 + $0x48] sm:$0xf]
    %v3001 = vld [vmem:[#allocation9 + $0x4c] sm:$0xf]
    %v3002 = vld [vmem:[#allocation9 + $0x50] sm:$0xf]
    %v3003 = vld [vmem:[#allocation9 + $0x54] sm:$0xf]
    %v3004 = vld [vmem:[#allocation9 + $0x58] sm:$0xf]
    %v3005 = vld [vmem:[#allocation9 + $0x5c] sm:$0xf]
    %v3006 = vld [vmem:[#allocation9 + $0x60] sm:$0xf]
    %v3007 = vld [vmem:[#allocation9 + $0x64] sm:$0xf]
    %v3008 = vld [vmem:[#allocation9 + $0x68] sm:$0xf]
    %v3009 = vld [vmem:[#allocation9 + $0x6c] sm:$0xf]
    %v3010 = vld [vmem:[#allocation9 + $0x70] sm:$0xf]
    %v3011 = vld [vmem:[#allocation9 + $0x74] sm:$0xf]
    %v3012 = vld [vmem:[#allocation9 + $0x78] sm:$0xf]
    %v3013 = vld [vmem:[#allocation9 + $0x7c] sm:$0xf]
    %v3014 = vld [vmem:[#allocation9 + $0x80] sm:$0xf]
    %v3015 = vld [vmem:[#allocation9 + $0x84] sm:$0xf]
    %v3016 = vld [vmem:[#allocation9 + $0x88] sm:$0xf]
    %v3017 = vld [vmem:[#allocation9 + $0x8c] sm:$0xf]
    %v3018 = vld [vmem:[#allocation9 + $0x90] sm:$0xf]
    %v3019 = vld [vmem:[#allocation9 + $0x94] sm:$0xf]
    %v3020 = vld [vmem:[#allocation9 + $0x98] sm:$0xf]
    %v3021 = vld [vmem:[#allocation9 + $0x9c] sm:$0xf]
    %v3022 = vld [vmem:[#allocation9 + $0xa0] sm:$0xf]
    %v3023 = vld [vmem:[#allocation9 + $0xa4] sm:$0xf]
    %v3024 = vld [vmem:[#allocation9 + $0xa8] sm:$0xf]
    %v3025 = vld [vmem:[#allocation9 + $0xac] sm:$0xf]
    %v3026 = vld [vmem:[#allocation9 + $0xb0] sm:$0xf]
    %v3027 = vld [vmem:[#allocation9 + $0xb4] sm:$0xf]
    %v3028 = vld [vmem:[#allocation9 + $0xb8] sm:$0xf]
    %v3029 = vld [vmem:[#allocation9 + $0xbc] sm:$0xf]
    %v3030 = vld [vmem:[#allocation9 + $0xc0] sm:$0xf]
    %v3031 = vld [vmem:[#allocation9 + $0xc4] sm:$0xf]
    %v3032 = vld [vmem:[#allocation9 + $0xc8] sm:$0xf]
    %v3033 = vld [vmem:[#allocation9 + $0xcc] sm:$0xf]
    %v3034 = vld [vmem:[#allocation9 + $0xd0] sm:$0xf]
    %v3035 = vld [vmem:[#allocation9 + $0xd4] sm:$0xf]
    %v3036 = vld [vmem:[#allocation9 + $0xd8] sm:$0xf]
    %v3037 = vld [vmem:[#allocation9 + $0xdc] sm:$0xf]
    %v3038 = vld [vmem:[#allocation9 + $0xe0] sm:$0xf]
    %v3039 = vld [vmem:[#allocation9 + $0xe4] sm:$0xf]
    %v3040 = vld [vmem:[#allocation9 + $0xe8] sm:$0xf]
    %v3041 = vld [vmem:[#allocation9 + $0xec] sm:$0xf]
    %v3042 = vld [vmem:[#allocation9 + $0xf0] sm:$0xf]
    %v3043 = vld [vmem:[#allocation9 + $0xf4] sm:$0xf]
    %v3044 = vld [vmem:[#allocation9 + $0xf8] sm:$0xf]
    %v3045 = vld [vmem:[#allocation9 + $0xfc] sm:$0xf]
    %v3046 = vld [vmem:[%s6] sm:$0x1]
    %v3048 = vlaneseq
    %v3049 = vshrl.u32 %v3048, 7
    %v3050 = vsub.s32 0, %v3049
    %v3051 = vrot.slane %v3046, %v3050
    %v3117 = vunpack.c.l.b16 %v2982
    %v3118 = vunpack.c.l.b16 %v2983
    %v3119 = vunpack.c.l.b16 %v2984
    %v3120 = vunpack.c.l.b16 %v2985
    %v3121 = vunpack.c.l.b16 %v2986
    %v3122 = vunpack.c.l.b16 %v2987
    %v3123 = vunpack.c.l.b16 %v2988
    %v3124 = vunpack.c.l.b16 %v2989
    %v3125 = vunpack.c.l.b16 %v2990
    %v3126 = vunpack.c.l.b16 %v2991
    %v3127 = vunpack.c.l.b16 %v2992
    %v3128 = vunpack.c.l.b16 %v2993
    %v3129 = vunpack.c.l.b16 %v2994
    %v3130 = vunpack.c.l.b16 %v2995
    %v3131 = vunpack.c.l.b16 %v2996
    %v3132 = vunpack.c.l.b16 %v2997
    %v3133 = vunpack.c.l.b16 %v2998
    %v3134 = vunpack.c.l.b16 %v2999
    %v3135 = vunpack.c.l.b16 %v3000
    %v3136 = vunpack.c.l.b16 %v3001
    %v3137 = vunpack.c.l.b16 %v3002
    %v3138 = vunpack.c.l.b16 %v3003
    %v3139 = vunpack.c.l.b16 %v3004
    %v3140 = vunpack.c.l.b16 %v3005
    %v3141 = vunpack.c.l.b16 %v3006
    %v3142 = vunpack.c.l.b16 %v3007
    %v3143 = vunpack.c.l.b16 %v3008
    %v3144 = vunpack.c.l.b16 %v3009
    %v3145 = vunpack.c.l.b16 %v3010
    %v3146 = vunpack.c.l.b16 %v3011
    %v3147 = vunpack.c.l.b16 %v3012
    %v3148 = vunpack.c.l.b16 %v3013
    %v3149 = vunpack.c.l.b16 %v3014
    %v3150 = vunpack.c.l.b16 %v3015
    %v3151 = vunpack.c.l.b16 %v3016
    %v3152 = vunpack.c.l.b16 %v3017
    %v3153 = vunpack.c.l.b16 %v3018
    %v3154 = vunpack.c.l.b16 %v3019
    %v3155 = vunpack.c.l.b16 %v3020
    %v3156 = vunpack.c.l.b16 %v3021
    %v3157 = vunpack.c.l.b16 %v3022
    %v3158 = vunpack.c.l.b16 %v3023
    %v3159 = vunpack.c.l.b16 %v3024
    %v3160 = vunpack.c.l.b16 %v3025
    %v3161 = vunpack.c.l.b16 %v3026
    %v3162 = vunpack.c.l.b16 %v3027
    %v3163 = vunpack.c.l.b16 %v3028
    %v3164 = vunpack.c.l.b16 %v3029
    %v3165 = vunpack.c.l.b16 %v3030
    %v3166 = vunpack.c.l.b16 %v3031
    %v3167 = vunpack.c.l.b16 %v3032
    %v3168 = vunpack.c.l.b16 %v3033
    %v3169 = vunpack.c.l.b16 %v3034
    %v3170 = vunpack.c.l.b16 %v3035
    %v3171 = vunpack.c.l.b16 %v3036
    %v3172 = vunpack.c.l.b16 %v3037
    %v3173 = vunpack.c.l.b16 %v3038
    %v3174 = vunpack.c.l.b16 %v3039
    %v3175 = vunpack.c.l.b16 %v3040
    %v3176 = vunpack.c.l.b16 %v3041
    %v3177 = vunpack.c.l.b16 %v3042
    %v3178 = vunpack.c.l.b16 %v3043
    %v3179 = vunpack.c.l.b16 %v3044
    %v3180 = vunpack.c.l.b16 %v3045
    %v3181 = vpack.c.b16 %v3118, %v3117
    %v3182 = vpack.c.b16 %v3120, %v3119
    %v3183 = vpack.c.b16 %v3122, %v3121
    %v3184 = vpack.c.b16 %v3124, %v3123
    %v3185 = vpack.c.b16 %v3126, %v3125
    %v3186 = vpack.c.b16 %v3128, %v3127
    %v3187 = vpack.c.b16 %v3130, %v3129
    %v3188 = vpack.c.b16 %v3132, %v3131
    %v3189 = vpack.c.b16 %v3134, %v3133
    %v3190 = vpack.c.b16 %v3136, %v3135
    %v3191 = vpack.c.b16 %v3138, %v3137
    %v3192 = vpack.c.b16 %v3140, %v3139
    %v3193 = vpack.c.b16 %v3142, %v3141
    %v3194 = vpack.c.b16 %v3144, %v3143
    %v3195 = vpack.c.b16 %v3146, %v3145
    %v3196 = vpack.c.b16 %v3148, %v3147
    %v3197 = vpack.c.b16 %v3150, %v3149
    %v3198 = vpack.c.b16 %v3152, %v3151
    %v3199 = vpack.c.b16 %v3154, %v3153
    %v3200 = vpack.c.b16 %v3156, %v3155
    %v3201 = vpack.c.b16 %v3158, %v3157
    %v3202 = vpack.c.b16 %v3160, %v3159
    %v3203 = vpack.c.b16 %v3162, %v3161
    %v3204 = vpack.c.b16 %v3164, %v3163
    %v3205 = vpack.c.b16 %v3166, %v3165
    %v3206 = vpack.c.b16 %v3168, %v3167
    %v3207 = vpack.c.b16 %v3170, %v3169
    %v3208 = vpack.c.b16 %v3172, %v3171
    %v3209 = vpack.c.b16 %v3174, %v3173
    %v3210 = vpack.c.b16 %v3176, %v3175
    %v3211 = vpack.c.b16 %v3178, %v3177
    %v3212 = vpack.c.b16 %v3180, %v3179
    %3245 = vmatprep.subr.bf16.mxu0 0
    %3246 = vmatpush1.bf16.msra.mxu0 %v3188
    %3247 = vmatprep.subr.bf16.mxu0 0
    %3248 = vmatpush1.bf16.msra.mxu0 %v3187
    %3249 = vmatprep.subr.bf16.mxu0 0
    %3250 = vmatpush1.bf16.msra.mxu0 %v3186
    %3251 = vmatprep.subr.bf16.mxu0 0
    %3252 = vmatpush1.bf16.msra.mxu0 %v3185
    %3253 = vmatprep.subr.bf16.mxu0 0
    %3254 = vmatpush1.bf16.msra.mxu0 %v3184
    %3255 = vmatprep.subr.bf16.mxu0 0
    %3256 = vmatpush1.bf16.msra.mxu0 %v3183
    %3257 = vmatprep.subr.bf16.mxu0 0
    %3258 = vmatpush1.bf16.msra.mxu0 %v3182
    %3259 = vmatprep.subr.bf16.mxu0 0
    %3260 = vmatpush1.bf16.msra.mxu0 %v3181
    %3261 = vmatprep.subr.bf16.mxu0 0
    %3262 = vmatpush2.bf16.msra.mxu0 %v3196
    %3263 = vmatprep.subr.bf16.mxu0 0
    %3264 = vmatpush2.bf16.msra.mxu0 %v3195
    %3265 = vmatprep.subr.bf16.mxu0 0
    %3266 = vmatpush2.bf16.msra.mxu0 %v3194
    %3267 = vmatprep.subr.bf16.mxu0 0
    %3268 = vmatpush2.bf16.msra.mxu0 %v3193
    %3269 = vmatprep.subr.bf16.mxu0 0
    %3270 = vmatpush2.bf16.msra.mxu0 %v3192
    %3271 = vmatprep.subr.bf16.mxu0 0
    %3272 = vmatpush2.bf16.msra.mxu0 %v3191
    %3273 = vmatprep.subr.bf16.mxu0 0
    %3274 = vmatpush2.bf16.msra.mxu0 %v3190
    %3275 = vmatprep.subr.bf16.mxu0 0
    %3276 = vmatpush2.bf16.msra.mxu0 %v3189
    %3277 = vmatprep.mubr.bf16.mxu0 %v2979
    %3278 = vmatmul.mubr.bf16.gmra.mxu0 %v2978
    %v3279 = vpop.f32.mrf.mxu0
    %v3280 = vadd.f32 %v3051, %v3279
    %v3281 = vpop.f32.mrf.mxu0
    %v3282 = vpop.f32.mrf.mxu0
    %v3283 = vpop.f32.mrf.mxu0
    %3284 = vdwg.mxu0
    %3285 = vmatprep.subr.bf16.mxu0 0
    %3286 = vmatpush1.bf16.msra.mxu0 %v3204
    %3287 = vmatprep.subr.bf16.mxu0 0
    %3288 = vmatpush1.bf16.msra.mxu0 %v3203
    %3289 = vmatprep.subr.bf16.mxu0 0
    %3290 = vmatpush1.bf16.msra.mxu0 %v3202
    %3291 = vmatprep.subr.bf16.mxu0 0
    %3292 = vmatpush1.bf16.msra.mxu0 %v3201
    %3293 = vmatprep.subr.bf16.mxu0 0
    %3294 = vmatpush1.bf16.msra.mxu0 %v3200
    %3295 = vmatprep.subr.bf16.mxu0 0
    %3296 = vmatpush1.bf16.msra.mxu0 %v3199
    %3297 = vmatprep.subr.bf16.mxu0 0
    %3298 = vmatpush1.bf16.msra.mxu0 %v3198
    %3299 = vmatprep.subr.bf16.mxu0 0
    %3300 = vmatpush1.bf16.msra.mxu0 %v3197
    %3301 = vmatprep.subr.bf16.mxu0 0
    %3302 = vmatpush2.bf16.msra.mxu0 %v3212
    %3303 = vmatprep.subr.bf16.mxu0 0
    %3304 = vmatpush2.bf16.msra.mxu0 %v3211
    %3305 = vmatprep.subr.bf16.mxu0 0
    %3306 = vmatpush2.bf16.msra.mxu0 %v3210
    %3307 = vmatprep.subr.bf16.mxu0 0
    %3308 = vmatpush2.bf16.msra.mxu0 %v3209
    %3309 = vmatprep.subr.bf16.mxu0 0
    %3310 = vmatpush2.bf16.msra.mxu0 %v3208
    %3311 = vmatprep.subr.bf16.mxu0 0
    %3312 = vmatpush2.bf16.msra.mxu0 %v3207
    %3313 = vmatprep.subr.bf16.mxu0 0
    %3314 = vmatpush2.bf16.msra.mxu0 %v3206
    %3315 = vmatprep.subr.bf16.mxu0 0
    %3316 = vmatpush2.bf16.msra.mxu0 %v3205
    %3317 = vmatprep.mubr.bf16.mxu0 %v2981
    %3318 = vmatmul.mubr.bf16.gmra.mxu0 %v2980
    %v3319 = vpop.f32.mrf.mxu0
    %v3320 = vadd.f32 %v3280, %v3319
    %v3321 = vpop.f32.mrf.mxu0
    %v3322 = vpop.f32.mrf.mxu0
    %v3323 = vpop.f32.mrf.mxu0
    %3324 = vdwg.mxu0
    %v3325 = vpack.c.bf16 %v3320, %v3320
    %3326 = vst [vmem:[%s7] sm:$0x1] %v3325
    // Predicated region
    $region50: #{classifier_forward.1} parent=1 // pred_check
      _
    $region51: #{classifier_forward.1} parent=1 // pred_check_branch
      %3328 = sbr.rel (0) target = $region53
    $region52: #{classifier_forward.1} parent=1 // pred_region
      _
    $region53: #{classifier_forward.1} parent=1 // pred_fallthru
      _
    // Predicated region
    $region54: #{classifier_forward.1} parent=1 // pred_check
      _
    $region55: #{classifier_forward.1} parent=1 // pred_check_branch
      %3330 = sbr.rel (0) target = $region57
    $region56: #{classifier_forward.1} parent=1 // pred_region
      _
    $region57: #{classifier_forward.1} parent=1 // pred_fallthru
      _
    %3331 = vsyncpa [#allocation3], 1
    %3332 = vsyncpa [#allocation5], 1
    %3333 = vsyncpa [#allocation8], 1

</llo_original>
